<compile_context>
chip_gen: v5e
topology: v5e:2x2
jax: 0.10.0
libtpu: 0.0.40
codegen_flags: <defaults>
</compile_context>

<pallas_src>
import jax
import jax.numpy as jnp
import numpy as np
from jax import lax
from jax.experimental import pallas as pl
from jax.experimental.pallas import tpu as pltpu


# ----------------------------------------------------------------------------
# In-kernel helpers (pure jnp on loaded values; one batch example at a time)
# ----------------------------------------------------------------------------
def _causal_conv(hb, w_ref, b_ref, K, dilation):
    """Causal dilated conv as K accumulating matmuls.

    hb:    (T, Cin) bf16 activations
    w_ref: (K, Cin, Cout) bf16 weight ref
    b_ref: (1, Cout) f32 bias ref
    out[t] = sum_k x[t - dilation*(K-1-k)] @ w[k]  (zero history), i.e.
    Conv1d(padding=(K-1)*dilation) + Chomp1d."""
    T = hb.shape[0]
    Cout = w_ref.shape[-1]
    t_idx = lax.broadcasted_iota(jnp.int32, (T, Cout), 0)
    acc = None
    for k in range(K):
        p = jnp.dot(hb, w_ref[k], preferred_element_type=jnp.float32)  # (T, Cout) f32
        shift = dilation * (K - 1 - k)
        if shift > 0:
            # delay by `shift` rows: roll along time (XLU) + zero the first `shift` rows (VPU)
            p = jnp.where(t_idx >= shift, pltpu.roll(p, shift=shift, axis=0), 0.0)
        acc = p if acc is None else acc + p
    return acc + b_ref[...]


def _temporal_block(h, w1, b1, w2, b2, wd, bd, K, dilation):
    """One TemporalBlock on (T, Cin) f32 activations (dropout == identity in eval)."""
    hb = h.astype(jnp.bfloat16)
    a1 = jnp.maximum(_causal_conv(hb, w1, b1, K, dilation), 0.0)                       # conv1+chomp+relu
    a2 = jnp.maximum(_causal_conv(a1.astype(jnp.bfloat16), w2, b2, K, dilation), 0.0)  # conv2+chomp+relu
    if wd is not None:  # 1x1 downsample conv on the residual path
        res = jnp.dot(hb, wd[...], preferred_element_type=jnp.float32) + bd[...]
    else:
        res = h
    return jnp.maximum(a2 + res, 0.0)


# ----------------------------------------------------------------------------
# Fused Pallas kernel: all blocks + global avg pool + FC (one grid step = one example)
# ----------------------------------------------------------------------------
def make_tcn_kernel(block_meta):
    def kernel(*refs):
        x_ref = refs[0]
        o_ref = refs[-1]

        h = x_ref[0].astype(jnp.float32)           # (T, C0) for this batch element
        idx = 1
        for meta in block_meta:
            w1, b1, w2, b2 = refs[idx:idx + 4]
            idx += 4
            if meta["has_ds"]:
                wd, bd = refs[idx:idx + 2]
                idx += 2
            else:
                wd = bd = None
            h = _temporal_block(h, w1, b1, w2, b2, wd, bd, meta["K"], meta["dilation"])

        fc_w = refs[idx]                            # (C_last, emb) bf16, 1/T pre-folded
        fc_b = refs[idx + 1]                        # (1, emb) f32

        # AdaptiveAvgPool1d(1): plain f32 sum over time (1/T is folded into fc_w), then FC.
        pooled = jnp.sum(h, axis=0, keepdims=True)  # (1, C_last) f32
        out = jnp.dot(pooled.astype(jnp.bfloat16), fc_w[...],
                      preferred_element_type=jnp.float32) + fc_b[...]
        o_ref[...] = out.reshape(o_ref.shape)

    return kernel


# ----------------------------------------------------------------------------
# One-time parameter preparation (host side, done once — not per call)
# ----------------------------------------------------------------------------
def prepare_tcn_params(params, T):
    """Cast matmul weights to bf16, keep biases f32, fold 1/T of the avg pool into fc_w."""
    block_meta, weights = [], []
    for blk in params["blocks"]:
        K, c_in, c_out = blk["w1"].shape
        has_ds = "wd" in blk
        block_meta.append(dict(K=K, dilation=blk["dilation"], has_ds=has_ds,
                               c_in=c_in, c_out=c_out))
        weights += [blk["w1"].astype(jnp.bfloat16), blk["b1"].astype(jnp.float32),
                    blk["w2"].astype(jnp.bfloat16), blk["b2"].astype(jnp.float32)]
        if has_ds:
            weights += [blk["wd"].astype(jnp.bfloat16), blk["bd"].astype(jnp.float32)]
    fc_w = (params["fc_w"] * (1.0 / float(T))).astype(jnp.bfloat16)
    weights += [fc_w, params["fc_b"].astype(jnp.float32)]
    emb_dim = params["fc_w"].shape[1]
    return block_meta, weights, emb_dim


# ----------------------------------------------------------------------------
# Wrapper: pallas_call plumbing (grid over batch, weights VMEM-resident)
# ----------------------------------------------------------------------------
def tcn_encoder_forward(x, block_meta, weights, emb_dim):
    """x: (B, T, num_inputs) — the PyTorch input *before* its transpose(1, 2)."""
    B, T, C0 = x.shape

    def resident_spec(a):
        nd = a.ndim
        return pl.BlockSpec(a.shape, lambda b, _nd=nd: (0,) * _nd)   # constant block index

    in_specs = [pl.BlockSpec((1, T, C0), lambda b: (b, 0, 0))]
    in_specs += [resident_spec(w) for w in weights]
    out_specs = pl.BlockSpec((1, 1, emb_dim), lambda b: (b, 0, 0))

    # Cost estimate (MXU flops; no transcendentals).
    flops_per_ex = 0
    for m in block_meta:
        K, ci, co = m["K"], m["c_in"], m["c_out"]
        flops_per_ex += 2 * T * K * ci * co          # conv1
        flops_per_ex += 2 * T * K * co * co          # conv2
        if m["has_ds"]:
            flops_per_ex += 2 * T * ci * co          # 1x1 residual conv
    c_last = block_meta[-1]["c_out"]
    flops_per_ex += 2 * c_last * emb_dim             # fc
    weight_bytes = sum(int(np.prod(w.shape)) * w.dtype.itemsize for w in weights)
    bytes_accessed = int(x.size * x.dtype.itemsize + weight_bytes + B * emb_dim * 4)

    # VMEM budget from actual resident buffers: weights (+headroom), double-buffered
    # per-example x/out blocks, and an activation working-set allowance.
    max_c = max(max(m["c_out"] for m in block_meta), C0, emb_dim)
    act_ws = 8 * T * max_c * 4
    vmem_limit = int(min(128 * 1024 * 1024,
                         max(8 * 1024 * 1024,
                             2 * weight_bytes + 4 * T * C0 * 4 + 4 * emb_dim * 4 + act_ws)))

    y = pl.pallas_call(
        make_tcn_kernel(block_meta),
        out_shape=jax.ShapeDtypeStruct((B, 1, emb_dim), jnp.float32),
        grid=(B,),
        in_specs=in_specs,
        out_specs=out_specs,
        compiler_params=pltpu.CompilerParams(
            dimension_semantics=("parallel",),
            vmem_limit_bytes=vmem_limit),
        cost_estimate=pl.CostEstimate(flops=int(B * flops_per_ex),
                                      transcendentals=0,
                                      bytes_accessed=bytes_accessed),
    )(x, *weights)
    return y[:, 0, :]


# ----------------------------------------------------------------------------
# Deterministic parameter init (mirrors shapes of the PyTorch module __init__)
# ----------------------------------------------------------------------------
def init_params(key, num_inputs, num_channels, kernel_size, emb_dim):
    params = {"blocks": []}
    for i, c_out in enumerate(num_channels):
        c_in = num_inputs if i == 0 else num_channels[i - 1]
        dilation = 2 ** i
        key, k1, k2, k3, k4, k5, k6 = jax.random.split(key, 7)
        # conv weights ~ N(0, 0.01) as in init_weights(); stored as (K, Cin, Cout)
        w1 = 0.01 * jax.random.normal(k1, (kernel_size, c_in, c_out), jnp.float32)
        w2 = 0.01 * jax.random.normal(k2, (kernel_size, c_out, c_out), jnp.float32)
        # conv biases: PyTorch default uniform(-1/sqrt(fan_in), 1/sqrt(fan_in))
        bnd1 = 1.0 / np.sqrt(c_in * kernel_size)
        bnd2 = 1.0 / np.sqrt(c_out * kernel_size)
        b1 = jax.random.uniform(k3, (1, c_out), jnp.float32, -bnd1, bnd1)
        b2 = jax.random.uniform(k4, (1, c_out), jnp.float32, -bnd2, bnd2)
        blk = {"dilation": dilation, "w1": w1, "b1": b1, "w2": w2, "b2": b2}
        if c_in != c_out:  # downsample 1x1 conv (weight ~ N(0,0.01), default-init bias)
            bnd_d = 1.0 / np.sqrt(c_in)
            blk["wd"] = 0.01 * jax.random.normal(k5, (c_in, c_out), jnp.float32)
            blk["bd"] = jax.random.uniform(k6, (1, c_out), jnp.float32, -bnd_d, bnd_d)
        params["blocks"].append(blk)

    key, kw, kb = jax.random.split(key, 3)
    c_last = num_channels[-1]
    bnd_fc = 1.0 / np.sqrt(c_last)
    params["fc_w"] = jax.random.uniform(kw, (c_last, emb_dim), jnp.float32, -bnd_fc, bnd_fc)
    params["fc_b"] = jax.random.uniform(kb, (1, emb_dim), jnp.float32, -bnd_fc, bnd_fc)
    return params


# ----------------------------------------------------------------------------
# Pure-JAX f32 reference (for correctness check only)
# ----------------------------------------------------------------------------
def _ref_causal_conv(x, w, b, dilation):
    B, T, _ = x.shape
    K = w.shape[0]
    out = jnp.zeros((B, T, w.shape[2]), jnp.float32)
    for k in range(K):
        shift = dilation * (K - 1 - k)
        xs = jnp.pad(x, ((0, 0), (shift, 0), (0, 0)))[:, :T, :]
        out = out + jnp.einsum("btc,cd->btd", xs, w[k])
    return out + b[None]


def _ref_forward(x, params):
    h = x
    for blk in params["blocks"]:
        d = blk["dilation"]
        h1 = jnp.maximum(_ref_causal_conv(h, blk["w1"], blk["b1"], d), 0.0)
        h2 = jnp.maximum(_ref_causal_conv(h1, blk["w2"], blk["b2"], d), 0.0)
        if "wd" in blk:
            res = jnp.einsum("btc,cd->btd", h, blk["wd"]) + blk["bd"][None]
        else:
            res = h
        h = jnp.maximum(h2 + res, 0.0)
    pooled = jnp.mean(h, axis=1)
    return pooled @ params["fc_w"] + params["fc_b"]


# ----------------------------------------------------------------------------
if __name__ == "__main__":
    # small shapes consistent with the module's forward: x is (batch, seq_len, num_inputs)
    B, T, num_inputs = 2, 16, 4
    num_channels = [8, 8, 16]      # exercises both the downsample and identity residual paths
    kernel_size = 2
    emb_dim = 32

    key = jax.random.PRNGKey(0)
    key, kx, kp = jax.random.split(key, 3)
    x = jax.random.normal(kx, (B, T, num_inputs), jnp.float32)
    params = init_params(kp, num_inputs, num_channels, kernel_size, emb_dim)

    # One-time weight prep (bf16 cast, 1/T fold), then the fused kernel call.
    block_meta, weights, emb = prepare_tcn_params(params, T)
    out = tcn_encoder_forward(x, block_meta, weights, emb)
    out = jax.block_until_ready(out)

    ref = _ref_forward(x, params)
    # bf16 matmul operands with f32 accumulation -> relaxed tolerance vs the f32 reference.
    np.testing.assert_allclose(np.asarray(out), np.asarray(ref), rtol=2e-2, atol=2e-2)

    print("KERNEL_OK")
</pallas_src>

<mosaic_0001>
module attributes {stable_mosaic.version = 11 : i64} {
  func.func @kernel(%arg0: i32, %arg1: memref<1x16x4xf32, #tpu.memory_space<vmem>>, %arg2: memref<2x4x8xbf16, #tpu.memory_space<vmem>>, %arg3: memref<1x8xf32, #tpu.memory_space<vmem>>, %arg4: memref<2x8x8xbf16, #tpu.memory_space<vmem>>, %arg5: memref<1x8xf32, #tpu.memory_space<vmem>>, %arg6: memref<4x8xbf16, #tpu.memory_space<vmem>>, %arg7: memref<1x8xf32, #tpu.memory_space<vmem>>, %arg8: memref<2x8x8xbf16, #tpu.memory_space<vmem>>, %arg9: memref<1x8xf32, #tpu.memory_space<vmem>>, %arg10: memref<2x8x8xbf16, #tpu.memory_space<vmem>>, %arg11: memref<1x8xf32, #tpu.memory_space<vmem>>, %arg12: memref<2x8x16xbf16, #tpu.memory_space<vmem>>, %arg13: memref<1x16xf32, #tpu.memory_space<vmem>>, %arg14: memref<2x16x16xbf16, #tpu.memory_space<vmem>>, %arg15: memref<1x16xf32, #tpu.memory_space<vmem>>, %arg16: memref<8x16xbf16, #tpu.memory_space<vmem>>, %arg17: memref<1x16xf32, #tpu.memory_space<vmem>>, %arg18: memref<16x32xbf16, #tpu.memory_space<vmem>>, %arg19: memref<1x32xf32, #tpu.memory_space<vmem>>, %arg20: memref<1x1x32xf32, #tpu.memory_space<vmem>>) attributes {dimension_semantics = [#tpu.dimension_semantics<parallel>], iteration_bounds = array<i64: 2>, scalar_prefetch = 0 : i64, scratch_operands = 0 : i64, tpu.core_type = #tpu.core_type<tc>, window_params = [{transform_indices = @transform_0, window_bounds = array<i64: 1, 16, 4>}, {pipeline_mode = #tpu.pipeline_mode<synchronous>, transform_indices = @transform_1, window_bounds = array<i64: 2, 4, 8>}, {pipeline_mode = #tpu.pipeline_mode<synchronous>, transform_indices = @transform_2, window_bounds = array<i64: 1, 8>}, {pipeline_mode = #tpu.pipeline_mode<synchronous>, transform_indices = @transform_3, window_bounds = array<i64: 2, 8, 8>}, {pipeline_mode = #tpu.pipeline_mode<synchronous>, transform_indices = @transform_4, window_bounds = array<i64: 1, 8>}, {pipeline_mode = #tpu.pipeline_mode<synchronous>, transform_indices = @transform_5, window_bounds = array<i64: 4, 8>}, {pipeline_mode = #tpu.pipeline_mode<synchronous>, transform_indices = @transform_6, window_bounds = array<i64: 1, 8>}, {pipeline_mode = #tpu.pipeline_mode<synchronous>, transform_indices = @transform_7, window_bounds = array<i64: 2, 8, 8>}, {pipeline_mode = #tpu.pipeline_mode<synchronous>, transform_indices = @transform_8, window_bounds = array<i64: 1, 8>}, {pipeline_mode = #tpu.pipeline_mode<synchronous>, transform_indices = @transform_9, window_bounds = array<i64: 2, 8, 8>}, {pipeline_mode = #tpu.pipeline_mode<synchronous>, transform_indices = @transform_10, window_bounds = array<i64: 1, 8>}, {pipeline_mode = #tpu.pipeline_mode<synchronous>, transform_indices = @transform_11, window_bounds = array<i64: 2, 8, 16>}, {pipeline_mode = #tpu.pipeline_mode<synchronous>, transform_indices = @transform_12, window_bounds = array<i64: 1, 16>}, {pipeline_mode = #tpu.pipeline_mode<synchronous>, transform_indices = @transform_13, window_bounds = array<i64: 2, 16, 16>}, {pipeline_mode = #tpu.pipeline_mode<synchronous>, transform_indices = @transform_14, window_bounds = array<i64: 1, 16>}, {pipeline_mode = #tpu.pipeline_mode<synchronous>, transform_indices = @transform_15, window_bounds = array<i64: 8, 16>}, {pipeline_mode = #tpu.pipeline_mode<synchronous>, transform_indices = @transform_16, window_bounds = array<i64: 1, 16>}, {pipeline_mode = #tpu.pipeline_mode<synchronous>, transform_indices = @transform_17, window_bounds = array<i64: 16, 32>}, {pipeline_mode = #tpu.pipeline_mode<synchronous>, transform_indices = @transform_18, window_bounds = array<i64: 1, 32>}, {transform_indices = @transform_19, window_bounds = array<i64: 1, 1, 32>}]} {
    %c0 = arith.constant 0 : index
    %c0_0 = arith.constant 0 : index
    %c0_1 = arith.constant 0 : index
    %0 = vector.load %arg1[%c0, %c0_0, %c0_1] : memref<1x16x4xf32, #tpu.memory_space<vmem>>, vector<1x16x4xf32>
    %1 = vector.shape_cast %0 : vector<1x16x4xf32> to vector<16x4xf32>
    %2 = arith.truncf %1 : vector<16x4xf32> to vector<16x4xbf16>
    %3 = tpu.iota {dimensions = array<i32: 0>} : vector<16x8xi32>
    %c0_2 = arith.constant 0 : index
    %c0_3 = arith.constant 0 : index
    %c0_4 = arith.constant 0 : index
    %4 = vector.load %arg2[%c0_2, %c0_3, %c0_4] : memref<2x4x8xbf16, #tpu.memory_space<vmem>>, vector<1x4x8xbf16>
    %5 = vector.shape_cast %4 : vector<1x4x8xbf16> to vector<4x8xbf16>
    %cst = arith.constant dense<0.000000e+00> : vector<16x8xf32>
    %6 = tpu.matmul %2, %5, %cst {dimension_numbers = #tpu.dot_dimension_numbers<[1], [0], [0], [1], [0, 0, 1, 1], [], []>} : vector<16x4xbf16>, vector<4x8xbf16>, vector<16x8xf32> -> vector<16x8xf32>
    %c1_i32 = arith.constant 1 : i32
    %7 = vector.broadcast %c1_i32 : i32 to vector<16x8xi32>
    %8 = arith.cmpi sge, %3, %7 : vector<16x8xi32>
    %c1_i32_5 = arith.constant 1 : i32
    %9 = tpu.dynamic_rotate %6 by %c1_i32_5 dim 0 : vector<16x8xf32>, i32 -> vector<16x8xf32>
    %cst_6 = arith.constant 0.000000e+00 : f32
    %10 = vector.broadcast %cst_6 : f32 to vector<16x8xf32>
    %11 = arith.select %8, %9, %10 : vector<16x8xi1>, vector<16x8xf32>
    %c1 = arith.constant 1 : index
    %c0_7 = arith.constant 0 : index
    %c0_8 = arith.constant 0 : index
    %12 = vector.load %arg2[%c1, %c0_7, %c0_8] : memref<2x4x8xbf16, #tpu.memory_space<vmem>>, vector<1x4x8xbf16>
    %13 = vector.shape_cast %12 : vector<1x4x8xbf16> to vector<4x8xbf16>
    %cst_9 = arith.constant dense<0.000000e+00> : vector<16x8xf32>
    %14 = tpu.matmul %2, %13, %cst_9 {dimension_numbers = #tpu.dot_dimension_numbers<[1], [0], [0], [1], [0, 0, 1, 1], [], []>} : vector<16x4xbf16>, vector<4x8xbf16>, vector<16x8xf32> -> vector<16x8xf32>
    %15 = arith.addf %11, %14 : vector<16x8xf32>
    %c0_10 = arith.constant 0 : index
    %c0_11 = arith.constant 0 : index
    %16 = vector.load %arg3[%c0_10, %c0_11] : memref<1x8xf32, #tpu.memory_space<vmem>>, vector<1x8xf32>
    %17 = vector.broadcast %16 : vector<1x8xf32> to vector<16x8xf32>
    %18 = arith.addf %15, %17 : vector<16x8xf32>
    %cst_12 = arith.constant 0.000000e+00 : f32
    %19 = vector.broadcast %cst_12 : f32 to vector<16x8xf32>
    %20 = arith.maximumf %18, %19 : vector<16x8xf32>
    %21 = arith.truncf %20 : vector<16x8xf32> to vector<16x8xbf16>
    %22 = tpu.iota {dimensions = array<i32: 0>} : vector<16x8xi32>
    %c0_13 = arith.constant 0 : index
    %c0_14 = arith.constant 0 : index
    %c0_15 = arith.constant 0 : index
    %23 = vector.load %arg4[%c0_13, %c0_14, %c0_15] : memref<2x8x8xbf16, #tpu.memory_space<vmem>>, vector<1x8x8xbf16>
    %24 = vector.shape_cast %23 : vector<1x8x8xbf16> to vector<8x8xbf16>
    %cst_16 = arith.constant dense<0.000000e+00> : vector<16x8xf32>
    %25 = tpu.matmul %21, %24, %cst_16 {dimension_numbers = #tpu.dot_dimension_numbers<[1], [0], [0], [1], [0, 0, 1, 1], [], []>} : vector<16x8xbf16>, vector<8x8xbf16>, vector<16x8xf32> -> vector<16x8xf32>
    %c1_i32_17 = arith.constant 1 : i32
    %26 = vector.broadcast %c1_i32_17 : i32 to vector<16x8xi32>
    %27 = arith.cmpi sge, %22, %26 : vector<16x8xi32>
    %c1_i32_18 = arith.constant 1 : i32
    %28 = tpu.dynamic_rotate %25 by %c1_i32_18 dim 0 : vector<16x8xf32>, i32 -> vector<16x8xf32>
    %cst_19 = arith.constant 0.000000e+00 : f32
    %29 = vector.broadcast %cst_19 : f32 to vector<16x8xf32>
    %30 = arith.select %27, %28, %29 : vector<16x8xi1>, vector<16x8xf32>
    %c1_20 = arith.constant 1 : index
    %c0_21 = arith.constant 0 : index
    %c0_22 = arith.constant 0 : index
    %31 = vector.load %arg4[%c1_20, %c0_21, %c0_22] : memref<2x8x8xbf16, #tpu.memory_space<vmem>>, vector<1x8x8xbf16>
    %32 = vector.shape_cast %31 : vector<1x8x8xbf16> to vector<8x8xbf16>
    %cst_23 = arith.constant dense<0.000000e+00> : vector<16x8xf32>
    %33 = tpu.matmul %21, %32, %cst_23 {dimension_numbers = #tpu.dot_dimension_numbers<[1], [0], [0], [1], [0, 0, 1, 1], [], []>} : vector<16x8xbf16>, vector<8x8xbf16>, vector<16x8xf32> -> vector<16x8xf32>
    %34 = arith.addf %30, %33 : vector<16x8xf32>
    %c0_24 = arith.constant 0 : index
    %c0_25 = arith.constant 0 : index
    %35 = vector.load %arg5[%c0_24, %c0_25] : memref<1x8xf32, #tpu.memory_space<vmem>>, vector<1x8xf32>
    %36 = vector.broadcast %35 : vector<1x8xf32> to vector<16x8xf32>
    %37 = arith.addf %34, %36 : vector<16x8xf32>
    %cst_26 = arith.constant 0.000000e+00 : f32
    %38 = vector.broadcast %cst_26 : f32 to vector<16x8xf32>
    %39 = arith.maximumf %37, %38 : vector<16x8xf32>
    %c0_27 = arith.constant 0 : index
    %c0_28 = arith.constant 0 : index
    %40 = vector.load %arg6[%c0_27, %c0_28] : memref<4x8xbf16, #tpu.memory_space<vmem>>, vector<4x8xbf16>
    %cst_29 = arith.constant dense<0.000000e+00> : vector<16x8xf32>
    %41 = tpu.matmul %2, %40, %cst_29 {dimension_numbers = #tpu.dot_dimension_numbers<[1], [0], [0], [1], [0, 0, 1, 1], [], []>} : vector<16x4xbf16>, vector<4x8xbf16>, vector<16x8xf32> -> vector<16x8xf32>
    %c0_30 = arith.constant 0 : index
    %c0_31 = arith.constant 0 : index
    %42 = vector.load %arg7[%c0_30, %c0_31] : memref<1x8xf32, #tpu.memory_space<vmem>>, vector<1x8xf32>
    %43 = vector.broadcast %42 : vector<1x8xf32> to vector<16x8xf32>
    %44 = arith.addf %41, %43 : vector<16x8xf32>
    %45 = arith.addf %39, %44 : vector<16x8xf32>
    %cst_32 = arith.constant 0.000000e+00 : f32
    %46 = vector.broadcast %cst_32 : f32 to vector<16x8xf32>
    %47 = arith.maximumf %45, %46 : vector<16x8xf32>
    %48 = arith.truncf %47 : vector<16x8xf32> to vector<16x8xbf16>
    %49 = tpu.iota {dimensions = array<i32: 0>} : vector<16x8xi32>
    %c0_33 = arith.constant 0 : index
    %c0_34 = arith.constant 0 : index
    %c0_35 = arith.constant 0 : index
    %50 = vector.load %arg8[%c0_33, %c0_34, %c0_35] : memref<2x8x8xbf16, #tpu.memory_space<vmem>>, vector<1x8x8xbf16>
    %51 = vector.shape_cast %50 : vector<1x8x8xbf16> to vector<8x8xbf16>
    %cst_36 = arith.constant dense<0.000000e+00> : vector<16x8xf32>
    %52 = tpu.matmul %48, %51, %cst_36 {dimension_numbers = #tpu.dot_dimension_numbers<[1], [0], [0], [1], [0, 0, 1, 1], [], []>} : vector<16x8xbf16>, vector<8x8xbf16>, vector<16x8xf32> -> vector<16x8xf32>
    %c2_i32 = arith.constant 2 : i32
    %53 = vector.broadcast %c2_i32 : i32 to vector<16x8xi32>
    %54 = arith.cmpi sge, %49, %53 : vector<16x8xi32>
    %c2_i32_37 = arith.constant 2 : i32
    %55 = tpu.dynamic_rotate %52 by %c2_i32_37 dim 0 : vector<16x8xf32>, i32 -> vector<16x8xf32>
    %cst_38 = arith.constant 0.000000e+00 : f32
    %56 = vector.broadcast %cst_38 : f32 to vector<16x8xf32>
    %57 = arith.select %54, %55, %56 : vector<16x8xi1>, vector<16x8xf32>
    %c1_39 = arith.constant 1 : index
    %c0_40 = arith.constant 0 : index
    %c0_41 = arith.constant 0 : index
    %58 = vector.load %arg8[%c1_39, %c0_40, %c0_41] : memref<2x8x8xbf16, #tpu.memory_space<vmem>>, vector<1x8x8xbf16>
    %59 = vector.shape_cast %58 : vector<1x8x8xbf16> to vector<8x8xbf16>
    %cst_42 = arith.constant dense<0.000000e+00> : vector<16x8xf32>
    %60 = tpu.matmul %48, %59, %cst_42 {dimension_numbers = #tpu.dot_dimension_numbers<[1], [0], [0], [1], [0, 0, 1, 1], [], []>} : vector<16x8xbf16>, vector<8x8xbf16>, vector<16x8xf32> -> vector<16x8xf32>
    %61 = arith.addf %57, %60 : vector<16x8xf32>
    %c0_43 = arith.constant 0 : index
    %c0_44 = arith.constant 0 : index
    %62 = vector.load %arg9[%c0_43, %c0_44] : memref<1x8xf32, #tpu.memory_space<vmem>>, vector<1x8xf32>
    %63 = vector.broadcast %62 : vector<1x8xf32> to vector<16x8xf32>
    %64 = arith.addf %61, %63 : vector<16x8xf32>
    %cst_45 = arith.constant 0.000000e+00 : f32
    %65 = vector.broadcast %cst_45 : f32 to vector<16x8xf32>
    %66 = arith.maximumf %64, %65 : vector<16x8xf32>
    %67 = arith.truncf %66 : vector<16x8xf32> to vector<16x8xbf16>
    %68 = tpu.iota {dimensions = array<i32: 0>} : vector<16x8xi32>
    %c0_46 = arith.constant 0 : index
    %c0_47 = arith.constant 0 : index
    %c0_48 = arith.constant 0 : index
    %69 = vector.load %arg10[%c0_46, %c0_47, %c0_48] : memref<2x8x8xbf16, #tpu.memory_space<vmem>>, vector<1x8x8xbf16>
    %70 = vector.shape_cast %69 : vector<1x8x8xbf16> to vector<8x8xbf16>
    %cst_49 = arith.constant dense<0.000000e+00> : vector<16x8xf32>
    %71 = tpu.matmul %67, %70, %cst_49 {dimension_numbers = #tpu.dot_dimension_numbers<[1], [0], [0], [1], [0, 0, 1, 1], [], []>} : vector<16x8xbf16>, vector<8x8xbf16>, vector<16x8xf32> -> vector<16x8xf32>
    %c2_i32_50 = arith.constant 2 : i32
    %72 = vector.broadcast %c2_i32_50 : i32 to vector<16x8xi32>
    %73 = arith.cmpi sge, %68, %72 : vector<16x8xi32>
    %c2_i32_51 = arith.constant 2 : i32
    %74 = tpu.dynamic_rotate %71 by %c2_i32_51 dim 0 : vector<16x8xf32>, i32 -> vector<16x8xf32>
    %cst_52 = arith.constant 0.000000e+00 : f32
    %75 = vector.broadcast %cst_52 : f32 to vector<16x8xf32>
    %76 = arith.select %73, %74, %75 : vector<16x8xi1>, vector<16x8xf32>
    %c1_53 = arith.constant 1 : index
    %c0_54 = arith.constant 0 : index
    %c0_55 = arith.constant 0 : index
    %77 = vector.load %arg10[%c1_53, %c0_54, %c0_55] : memref<2x8x8xbf16, #tpu.memory_space<vmem>>, vector<1x8x8xbf16>
    %78 = vector.shape_cast %77 : vector<1x8x8xbf16> to vector<8x8xbf16>
    %cst_56 = arith.constant dense<0.000000e+00> : vector<16x8xf32>
    %79 = tpu.matmul %67, %78, %cst_56 {dimension_numbers = #tpu.dot_dimension_numbers<[1], [0], [0], [1], [0, 0, 1, 1], [], []>} : vector<16x8xbf16>, vector<8x8xbf16>, vector<16x8xf32> -> vector<16x8xf32>
    %80 = arith.addf %76, %79 : vector<16x8xf32>
    %c0_57 = arith.constant 0 : index
    %c0_58 = arith.constant 0 : index
    %81 = vector.load %arg11[%c0_57, %c0_58] : memref<1x8xf32, #tpu.memory_space<vmem>>, vector<1x8xf32>
    %82 = vector.broadcast %81 : vector<1x8xf32> to vector<16x8xf32>
    %83 = arith.addf %80, %82 : vector<16x8xf32>
    %cst_59 = arith.constant 0.000000e+00 : f32
    %84 = vector.broadcast %cst_59 : f32 to vector<16x8xf32>
    %85 = arith.maximumf %83, %84 : vector<16x8xf32>
    %86 = arith.addf %85, %47 : vector<16x8xf32>
    %cst_60 = arith.constant 0.000000e+00 : f32
    %87 = vector.broadcast %cst_60 : f32 to vector<16x8xf32>
    %88 = arith.maximumf %86, %87 : vector<16x8xf32>
    %89 = arith.truncf %88 : vector<16x8xf32> to vector<16x8xbf16>
    %90 = tpu.iota {dimensions = array<i32: 0>} : vector<16x16xi32>
    %c0_61 = arith.constant 0 : index
    %c0_62 = arith.constant 0 : index
    %c0_63 = arith.constant 0 : index
    %91 = vector.load %arg12[%c0_61, %c0_62, %c0_63] : memref<2x8x16xbf16, #tpu.memory_space<vmem>>, vector<1x8x16xbf16>
    %92 = vector.shape_cast %91 : vector<1x8x16xbf16> to vector<8x16xbf16>
    %cst_64 = arith.constant dense<0.000000e+00> : vector<16x16xf32>
    %93 = tpu.matmul %89, %92, %cst_64 {dimension_numbers = #tpu.dot_dimension_numbers<[1], [0], [0], [1], [0, 0, 1, 1], [], []>} : vector<16x8xbf16>, vector<8x16xbf16>, vector<16x16xf32> -> vector<16x16xf32>
    %c4_i32 = arith.constant 4 : i32
    %94 = vector.broadcast %c4_i32 : i32 to vector<16x16xi32>
    %95 = arith.cmpi sge, %90, %94 : vector<16x16xi32>
    %c4_i32_65 = arith.constant 4 : i32
    %96 = tpu.dynamic_rotate %93 by %c4_i32_65 dim 0 : vector<16x16xf32>, i32 -> vector<16x16xf32>
    %cst_66 = arith.constant 0.000000e+00 : f32
    %97 = vector.broadcast %cst_66 : f32 to vector<16x16xf32>
    %98 = arith.select %95, %96, %97 : vector<16x16xi1>, vector<16x16xf32>
    %c1_67 = arith.constant 1 : index
    %c0_68 = arith.constant 0 : index
    %c0_69 = arith.constant 0 : index
    %99 = vector.load %arg12[%c1_67, %c0_68, %c0_69] : memref<2x8x16xbf16, #tpu.memory_space<vmem>>, vector<1x8x16xbf16>
    %100 = vector.shape_cast %99 : vector<1x8x16xbf16> to vector<8x16xbf16>
    %cst_70 = arith.constant dense<0.000000e+00> : vector<16x16xf32>
    %101 = tpu.matmul %89, %100, %cst_70 {dimension_numbers = #tpu.dot_dimension_numbers<[1], [0], [0], [1], [0, 0, 1, 1], [], []>} : vector<16x8xbf16>, vector<8x16xbf16>, vector<16x16xf32> -> vector<16x16xf32>
    %102 = arith.addf %98, %101 : vector<16x16xf32>
    %c0_71 = arith.constant 0 : index
    %c0_72 = arith.constant 0 : index
    %103 = vector.load %arg13[%c0_71, %c0_72] : memref<1x16xf32, #tpu.memory_space<vmem>>, vector<1x16xf32>
    %104 = vector.broadcast %103 : vector<1x16xf32> to vector<16x16xf32>
    %105 = arith.addf %102, %104 : vector<16x16xf32>
    %cst_73 = arith.constant 0.000000e+00 : f32
    %106 = vector.broadcast %cst_73 : f32 to vector<16x16xf32>
    %107 = arith.maximumf %105, %106 : vector<16x16xf32>
    %108 = arith.truncf %107 : vector<16x16xf32> to vector<16x16xbf16>
    %109 = tpu.iota {dimensions = array<i32: 0>} : vector<16x16xi32>
    %c0_74 = arith.constant 0 : index
    %c0_75 = arith.constant 0 : index
    %c0_76 = arith.constant 0 : index
    %110 = vector.load %arg14[%c0_74, %c0_75, %c0_76] : memref<2x16x16xbf16, #tpu.memory_space<vmem>>, vector<1x16x16xbf16>
    %111 = vector.shape_cast %110 : vector<1x16x16xbf16> to vector<16x16xbf16>
    %cst_77 = arith.constant dense<0.000000e+00> : vector<16x16xf32>
    %112 = tpu.matmul %108, %111, %cst_77 {dimension_numbers = #tpu.dot_dimension_numbers<[1], [0], [0], [1], [0, 0, 1, 1], [], []>} : vector<16x16xbf16>, vector<16x16xbf16>, vector<16x16xf32> -> vector<16x16xf32>
    %c4_i32_78 = arith.constant 4 : i32
    %113 = vector.broadcast %c4_i32_78 : i32 to vector<16x16xi32>
    %114 = arith.cmpi sge, %109, %113 : vector<16x16xi32>
    %c4_i32_79 = arith.constant 4 : i32
    %115 = tpu.dynamic_rotate %112 by %c4_i32_79 dim 0 : vector<16x16xf32>, i32 -> vector<16x16xf32>
    %cst_80 = arith.constant 0.000000e+00 : f32
    %116 = vector.broadcast %cst_80 : f32 to vector<16x16xf32>
    %117 = arith.select %114, %115, %116 : vector<16x16xi1>, vector<16x16xf32>
    %c1_81 = arith.constant 1 : index
    %c0_82 = arith.constant 0 : index
    %c0_83 = arith.constant 0 : index
    %118 = vector.load %arg14[%c1_81, %c0_82, %c0_83] : memref<2x16x16xbf16, #tpu.memory_space<vmem>>, vector<1x16x16xbf16>
    %119 = vector.shape_cast %118 : vector<1x16x16xbf16> to vector<16x16xbf16>
    %cst_84 = arith.constant dense<0.000000e+00> : vector<16x16xf32>
    %120 = tpu.matmul %108, %119, %cst_84 {dimension_numbers = #tpu.dot_dimension_numbers<[1], [0], [0], [1], [0, 0, 1, 1], [], []>} : vector<16x16xbf16>, vector<16x16xbf16>, vector<16x16xf32> -> vector<16x16xf32>
    %121 = arith.addf %117, %120 : vector<16x16xf32>
    %c0_85 = arith.constant 0 : index
    %c0_86 = arith.constant 0 : index
    %122 = vector.load %arg15[%c0_85, %c0_86] : memref<1x16xf32, #tpu.memory_space<vmem>>, vector<1x16xf32>
    %123 = vector.broadcast %122 : vector<1x16xf32> to vector<16x16xf32>
    %124 = arith.addf %121, %123 : vector<16x16xf32>
    %cst_87 = arith.constant 0.000000e+00 : f32
    %125 = vector.broadcast %cst_87 : f32 to vector<16x16xf32>
    %126 = arith.maximumf %124, %125 : vector<16x16xf32>
    %c0_88 = arith.constant 0 : index
    %c0_89 = arith.constant 0 : index
    %127 = vector.load %arg16[%c0_88, %c0_89] : memref<8x16xbf16, #tpu.memory_space<vmem>>, vector<8x16xbf16>
    %cst_90 = arith.constant dense<0.000000e+00> : vector<16x16xf32>
    %128 = tpu.matmul %89, %127, %cst_90 {dimension_numbers = #tpu.dot_dimension_numbers<[1], [0], [0], [1], [0, 0, 1, 1], [], []>} : vector<16x8xbf16>, vector<8x16xbf16>, vector<16x16xf32> -> vector<16x16xf32>
    %c0_91 = arith.constant 0 : index
    %c0_92 = arith.constant 0 : index
    %129 = vector.load %arg17[%c0_91, %c0_92] : memref<1x16xf32, #tpu.memory_space<vmem>>, vector<1x16xf32>
    %130 = vector.broadcast %129 : vector<1x16xf32> to vector<16x16xf32>
    %131 = arith.addf %128, %130 : vector<16x16xf32>
    %132 = arith.addf %126, %131 : vector<16x16xf32>
    %cst_93 = arith.constant 0.000000e+00 : f32
    %133 = vector.broadcast %cst_93 : f32 to vector<16x16xf32>
    %134 = arith.maximumf %132, %133 : vector<16x16xf32>
    %cst_94 = arith.constant dense<0.000000e+00> : vector<16xf32>
    %135 = vector.multi_reduction <add>, %134, %cst_94 [0] : vector<16x16xf32> to vector<16xf32>
    %136 = vector.shape_cast %135 : vector<16xf32> to vector<1x16xf32>
    %137 = arith.truncf %136 : vector<1x16xf32> to vector<1x16xbf16>
    %c0_95 = arith.constant 0 : index
    %c0_96 = arith.constant 0 : index
    %138 = vector.load %arg18[%c0_95, %c0_96] : memref<16x32xbf16, #tpu.memory_space<vmem>>, vector<16x32xbf16>
    %cst_97 = arith.constant dense<0.000000e+00> : vector<1x32xf32>
    %139 = tpu.matmul %137, %138, %cst_97 {dimension_numbers = #tpu.dot_dimension_numbers<[1], [0], [0], [1], [0, 0, 1, 1], [], []>} : vector<1x16xbf16>, vector<16x32xbf16>, vector<1x32xf32> -> vector<1x32xf32>
    %c0_98 = arith.constant 0 : index
    %c0_99 = arith.constant 0 : index
    %140 = vector.load %arg19[%c0_98, %c0_99] : memref<1x32xf32, #tpu.memory_space<vmem>>, vector<1x32xf32>
    %141 = arith.addf %139, %140 : vector<1x32xf32>
    %142 = vector.shape_cast %141 : vector<1x32xf32> to vector<1x1x32xf32>
    %c0_100 = arith.constant 0 : index
    %c0_101 = arith.constant 0 : index
    %c0_102 = arith.constant 0 : index
    %143 = vector.load %arg20[%c0_100, %c0_101, %c0_102] : memref<1x1x32xf32, #tpu.memory_space<vmem>>, vector<1x1x32xf32>
    tpu.vector_store %arg20[%c0_100, %c0_101, %c0_102], %142 {strides = array<i32>} : memref<1x1x32xf32, #tpu.memory_space<vmem>>, vector<1x1x32xf32>,
    return
  }
  func.func @transform_0(%arg0: i32) -> (i32, i32, i32) {
    %c0_i32 = arith.constant 0 : i32
    %c0_i32_0 = arith.constant 0 : i32
    %c0_i32_1 = arith.constant 0 : i32
    return %arg0, %c0_i32, %c0_i32_0 : i32, i32, i32
  }
  func.func @transform_1(%arg0: i32) -> (i32, i32, i32) {
    %c0_i32 = arith.constant 0 : i32
    %c0_i32_0 = arith.constant 0 : i32
    %c0_i32_1 = arith.constant 0 : i32
    %c0_i32_2 = arith.constant 0 : i32
    return %c0_i32, %c0_i32_0, %c0_i32_1 : i32, i32, i32
  }
  func.func @transform_2(%arg0: i32) -> (i32, i32) {
    %c0_i32 = arith.constant 0 : i32
    %c0_i32_0 = arith.constant 0 : i32
    %c0_i32_1 = arith.constant 0 : i32
    return %c0_i32, %c0_i32_0 : i32, i32
  }
  func.func @transform_3(%arg0: i32) -> (i32, i32, i32) {
    %c0_i32 = arith.constant 0 : i32
    %c0_i32_0 = arith.constant 0 : i32
    %c0_i32_1 = arith.constant 0 : i32
    %c0_i32_2 = arith.constant 0 : i32
    return %c0_i32, %c0_i32_0, %c0_i32_1 : i32, i32, i32
  }
  func.func @transform_4(%arg0: i32) -> (i32, i32) {
    %c0_i32 = arith.constant 0 : i32
    %c0_i32_0 = arith.constant 0 : i32
    %c0_i32_1 = arith.constant 0 : i32
    return %c0_i32, %c0_i32_0 : i32, i32
  }
  func.func @transform_5(%arg0: i32) -> (i32, i32) {
    %c0_i32 = arith.constant 0 : i32
    %c0_i32_0 = arith.constant 0 : i32
    %c0_i32_1 = arith.constant 0 : i32
    return %c0_i32, %c0_i32_0 : i32, i32
  }
  func.func @transform_6(%arg0: i32) -> (i32, i32) {
    %c0_i32 = arith.constant 0 : i32
    %c0_i32_0 = arith.constant 0 : i32
    %c0_i32_1 = arith.constant 0 : i32
    return %c0_i32, %c0_i32_0 : i32, i32
  }
  func.func @transform_7(%arg0: i32) -> (i32, i32, i32) {
    %c0_i32 = arith.constant 0 : i32
    %c0_i32_0 = arith.constant 0 : i32
    %c0_i32_1 = arith.constant 0 : i32
    %c0_i32_2 = arith.constant 0 : i32
    return %c0_i32, %c0_i32_0, %c0_i32_1 : i32, i32, i32
  }
  func.func @transform_8(%arg0: i32) -> (i32, i32) {
    %c0_i32 = arith.constant 0 : i32
    %c0_i32_0 = arith.constant 0 : i32
    %c0_i32_1 = arith.constant 0 : i32
    return %c0_i32, %c0_i32_0 : i32, i32
  }
  func.func @transform_9(%arg0: i32) -> (i32, i32, i32) {
    %c0_i32 = arith.constant 0 : i32
    %c0_i32_0 = arith.constant 0 : i32
    %c0_i32_1 = arith.constant 0 : i32
    %c0_i32_2 = arith.constant 0 : i32
    return %c0_i32, %c0_i32_0, %c0_i32_1 : i32, i32, i32
  }
  func.func @transform_10(%arg0: i32) -> (i32, i32) {
    %c0_i32 = arith.constant 0 : i32
    %c0_i32_0 = arith.constant 0 : i32
    %c0_i32_1 = arith.constant 0 : i32
    return %c0_i32, %c0_i32_0 : i32, i32
  }
  func.func @transform_11(%arg0: i32) -> (i32, i32, i32) {
    %c0_i32 = arith.constant 0 : i32
    %c0_i32_0 = arith.constant 0 : i32
    %c0_i32_1 = arith.constant 0 : i32
    %c0_i32_2 = arith.constant 0 : i32
    return %c0_i32, %c0_i32_0, %c0_i32_1 : i32, i32, i32
  }
  func.func @transform_12(%arg0: i32) -> (i32, i32) {
    %c0_i32 = arith.constant 0 : i32
    %c0_i32_0 = arith.constant 0 : i32
    %c0_i32_1 = arith.constant 0 : i32
    return %c0_i32, %c0_i32_0 : i32, i32
  }
  func.func @transform_13(%arg0: i32) -> (i32, i32, i32) {
    %c0_i32 = arith.constant 0 : i32
    %c0_i32_0 = arith.constant 0 : i32
    %c0_i32_1 = arith.constant 0 : i32
    %c0_i32_2 = arith.constant 0 : i32
    return %c0_i32, %c0_i32_0, %c0_i32_1 : i32, i32, i32
  }
  func.func @transform_14(%arg0: i32) -> (i32, i32) {
    %c0_i32 = arith.constant 0 : i32
    %c0_i32_0 = arith.constant 0 : i32
    %c0_i32_1 = arith.constant 0 : i32
    return %c0_i32, %c0_i32_0 : i32, i32
  }
  func.func @transform_15(%arg0: i32) -> (i32, i32) {
    %c0_i32 = arith.constant 0 : i32
    %c0_i32_0 = arith.constant 0 : i32
    %c0_i32_1 = arith.constant 0 : i32
    return %c0_i32, %c0_i32_0 : i32, i32
  }
  func.func @transform_16(%arg0: i32) -> (i32, i32) {
    %c0_i32 = arith.constant 0 : i32
    %c0_i32_0 = arith.constant 0 : i32
    %c0_i32_1 = arith.constant 0 : i32
    return %c0_i32, %c0_i32_0 : i32, i32
  }
  func.func @transform_17(%arg0: i32) -> (i32, i32) {
    %c0_i32 = arith.constant 0 : i32
    %c0_i32_0 = arith.constant 0 : i32
    %c0_i32_1 = arith.constant 0 : i32
    return %c0_i32, %c0_i32_0 : i32, i32
  }
  func.func @transform_18(%arg0: i32) -> (i32, i32) {
    %c0_i32 = arith.constant 0 : i32
    %c0_i32_0 = arith.constant 0 : i32
    %c0_i32_1 = arith.constant 0 : i32
    return %c0_i32, %c0_i32_0 : i32, i32
  }
  func.func @transform_19(%arg0: i32) -> (i32, i32, i32) {
    %c0_i32 = arith.constant 0 : i32
    %c0_i32_0 = arith.constant 0 : i32
    %c0_i32_1 = arith.constant 0 : i32
    return %arg0, %c0_i32, %c0_i32_0 : i32, i32, i32
  }
}

</mosaic_0001>

<llo_original>
// kernel: tpu_custom_call.1
$region0: #{tpu_custom_call.1}
  #allocation0 [shape = 'u32[]', space=smem, size = 0x4, offset = 0x4, fixed_abs, tag = 'smem constant byte address 0x4 - core index']
  #allocation1 [shape = 'u32[72,128]{1,0:T(1,128)}', space=vmem, size = 0x9000, scoped, tag = 'internal scratch']
  %s0 = inlined_call_operand.vmem [shape: f32[2,16,4], index: 0, kind: input, shape index: {}]
  %s1 = inlined_call_operand.hbm [shape: bf16[2,4,8], index: 1, kind: input, shape index: {}]
  %s2 = inlined_call_operand.hbm [shape: f32[1,8], index: 2, kind: input, shape index: {}]
  %s3 = inlined_call_operand.vmem [shape: bf16[2,8,8], index: 3, kind: input, shape index: {}]
  %s4 = inlined_call_operand.hbm [shape: f32[1,8], index: 4, kind: input, shape index: {}]
  %s5 = inlined_call_operand.hbm [shape: bf16[4,8], index: 5, kind: input, shape index: {}]
  %s6 = inlined_call_operand.hbm [shape: f32[1,8], index: 6, kind: input, shape index: {}]
  %s7 = inlined_call_operand.vmem [shape: bf16[2,8,8], index: 7, kind: input, shape index: {}]
  %s8 = inlined_call_operand.hbm [shape: f32[1,8], index: 8, kind: input, shape index: {}]
  %s9 = inlined_call_operand.vmem [shape: bf16[2,8,8], index: 9, kind: input, shape index: {}]
  %s10 = inlined_call_operand.hbm [shape: f32[1,8], index: 10, kind: input, shape index: {}]
  %s11 = inlined_call_operand.vmem [shape: bf16[2,8,16], index: 11, kind: input, shape index: {}]
  %s12 = inlined_call_operand.hbm [shape: f32[1,16], index: 12, kind: input, shape index: {}]
  %s13 = inlined_call_operand.vmem [shape: bf16[2,16,16], index: 13, kind: input, shape index: {}]
  %s14 = inlined_call_operand.hbm [shape: f32[1,16], index: 14, kind: input, shape index: {}]
  %s15 = inlined_call_operand.hbm [shape: bf16[8,16], index: 15, kind: input, shape index: {}]
  %s16 = inlined_call_operand.hbm [shape: f32[1,16], index: 16, kind: input, shape index: {}]
  %s17 = inlined_call_operand.vmem [shape: bf16[16,32], index: 17, kind: input, shape index: {}]
  %s18 = inlined_call_operand.vmem [shape: f32[1,32], index: 18, kind: input, shape index: {}]
  %s19 = inlined_call_operand.hbm [shape: f32[2,1,32], index: 19, kind: output, shape index: {}]
  %s20 = sld [smem:[#allocation0]]
  $region153: #{tpu_custom_call.1} parent=0
    _
  %s22 = ssub.s32 1, %s20
  %s23 = scalar_select 0, %s22, %s20
  $region1: #{tpu_custom_call.1} parent=0
    #allocation2 [shape = 'u8[2048]{0}', space=vmem, size = 0x800, scoped, tag = 'input window, operand 1, single buffered']
    #allocation3 [shape = 's32[2]{0}', space=sflag, size = 0x8, scoped, tag = 'scoped memory for tpu_custom_call.1']
    #allocation4 [shape = 's32[2]{0}', space=sflag, size = 0x8, scoped, tag = 'scoped memory for tpu_custom_call.1']
    #allocation5 [shape = 'u8[512]{0}', space=vmem, size = 0x400, scoped, tag = 'input window, operand 2, single buffered']
    #allocation6 [shape = 's32[1]{0}', space=sflag, size = 0x4, scoped, tag = 'scoped memory for tpu_custom_call.1']
    #allocation7 [shape = 'u8[512]{0}', space=vmem, size = 0x400, scoped, tag = 'input window, operand 4, single buffered']
    #allocation8 [shape = 'u8[1024]{0}', space=vmem, size = 0x400, scoped, tag = 'input window, operand 5, single buffered']
    #allocation9 [shape = 's32[1]{0}', space=sflag, size = 0x4, scoped, tag = 'scoped memory for tpu_custom_call.1']
    #allocation10 [shape = 'u8[512]{0}', space=vmem, size = 0x400, scoped, tag = 'input window, operand 6, single buffered']
    #allocation11 [shape = 'u8[512]{0}', space=vmem, size = 0x400, scoped, tag = 'input window, operand 8, single buffered']
    #allocation12 [shape = 's32[1]{0}', space=sflag, size = 0x4, scoped, tag = 'scoped memory for tpu_custom_call.1']
    #allocation13 [shape = 'u8[512]{0}', space=vmem, size = 0x400, scoped, tag = 'input window, operand 10, single buffered']
    #allocation14 [shape = 'u8[512]{0}', space=vmem, size = 0x400, scoped, tag = 'input window, operand 12, single buffered']
    #allocation15 [shape = 's32[1]{0}', space=sflag, size = 0x4, scoped, tag = 'scoped memory for tpu_custom_call.1']
    #allocation16 [shape = 'u8[512]{0}', space=vmem, size = 0x400, scoped, tag = 'input window, operand 14, single buffered']
    #allocation17 [shape = 'u8[2048]{0}', space=vmem, size = 0x800, scoped, tag = 'input window, operand 15, single buffered']
    #allocation18 [shape = 's32[1]{0}', space=sflag, size = 0x4, scoped, tag = 'scoped memory for tpu_custom_call.1']
    #allocation19 [shape = 'u8[512]{0}', space=vmem, size = 0x400, scoped, tag = 'input window, operand 16, single buffered']
    #allocation20 [shape = 'u8[1024]{0}', space=vmem, size = 0x400, scoped, tag = 'output window, operand 0']
    %24 = vsyncpa [#allocation3], 0
    %25 = vsyncpa [#allocation6], 0
    %26 = vsyncpa [#allocation9], 0
    %27 = vsyncpa [#allocation12], 0
    %28 = vsyncpa [#allocation15], 0
    %29 = vsyncpa [#allocation18], 0
    %30 = vsyncpa [#allocation4], 0
    %s31 = scalar_lea.sflag [#allocation4], 1
    %32 = vsyncpa %s31, 0
    loop: start=0, step=1, limit=4
    $region2: #{tpu_custom_call.1} parent=1 // loop_pre_header
      _
    $region3: #{tpu_custom_call.1} parent=1 // loop_header
      %s34 = sphi 0, %s38
      %p35 = scmp.ge.s32.totalorder %s34, 4
      %s44 = sphi 0, %s46
      %s47 = sphi 0, %s44
      %s48 = sphi 0, %s47
      %s64 = sphi 0, %s48
      %s68 = sphi 0, %s68
      %s70 = sphi 0, %s68
      %s71 = sphi 0, %s70
      %s85 = sphi 0, %s71
      %s89 = sphi 0, %s89
      %s91 = sphi 0, %s89
      %s92 = sphi 0, %s91
      %s106 = sphi 0, %s92
      %s110 = sphi 0, %s110
      %s112 = sphi 0, %s110
      %s113 = sphi 0, %s112
      %s127 = sphi 0, %s113
      %s131 = sphi 0, %s131
      %s133 = sphi 0, %s131
      %s134 = sphi 0, %s133
      %s148 = sphi 0, %s134
      %s152 = sphi 0, %s152
      %s154 = sphi 0, %s152
      %s155 = sphi 0, %s154
      %s169 = sphi 0, %s155
      %s173 = sphi 0, %s173
      %s175 = sphi 0, %s173
      %s176 = sphi 0, %s175
      %s190 = sphi 0, %s176
      %s194 = sphi 0, %s194
      %s196 = sphi 0, %s194
      %s197 = sphi 0, %s196
      %s211 = sphi 0, %s197
      %s215 = sphi 0, %s215
      %s217 = sphi 0, %s215
      %s218 = sphi 0, %s217
      %s232 = sphi 0, %s218
      %s236 = sphi 0, %s236
      %s238 = sphi 0, %s236
      %s239 = sphi 0, %s238
      %s253 = sphi 0, %s239
      %s257 = sphi 0, %s257
      %s259 = sphi 0, %s257
      %s260 = sphi 0, %s259
      %s274 = sphi 0, %s260
      %s278 = sphi 0, %s278
      %s280 = sphi 0, %s278
      %s281 = sphi 0, %s280
      %s295 = sphi 0, %s281
      %s299 = sphi 0, %s299
      %s301 = sphi 0, %s299
      %s302 = sphi 0, %s301
      %s316 = sphi 0, %s302
      %s320 = sphi 0, %s320
      %s322 = sphi 0, %s320
      %s323 = sphi 0, %s322
      %s337 = sphi 0, %s323
      %s341 = sphi 0, %s341
      %s343 = sphi 0, %s341
      %s344 = sphi 0, %s343
      %s358 = sphi 0, %s344
      %s362 = sphi 0, %s362
      %s364 = sphi 0, %s362
      %s365 = sphi 0, %s364
      %s379 = sphi 0, %s365
      %s383 = sphi 0, %s383
      %s385 = sphi 0, %s383
      %s386 = sphi 0, %s385
      %s400 = sphi 0, %s386
      %s404 = sphi 0, %s404
      %s406 = sphi 0, %s404
      %s407 = sphi 0, %s406
      %s421 = sphi 0, %s407
      %s425 = sphi 0, %s425
      %s427 = sphi 0, %s425
      %s428 = sphi 0, %s427
      %s442 = sphi 0, %s428
      %s448 = sphi 0, %s450
      %s451 = sphi 0, %s448
      %s452 = sphi 0, %s451
      %s468 = sphi 0, %s452
    $region4: #{tpu_custom_call.1} parent=1 // loop_header_branch
      %37 = sbr.rel (%p35) target = $region8
    $region5: #{tpu_custom_call.1} parent=1 // loop_body
      %s39 = ssub.s32 %s34, 1
      %s40 = ssub.s32 %s34, 2
      %s41 = sadd.s32 %s34, 1
      %s42 = ssub.s32 %s34, %s41
      %p43 = scmp.eq.s32.totalorder %s42, 0
      %s45 = sadd.s32 %s44, 1
      %s46 = scalar_select %p43, %s44, %s45
      %p49 = pneg %p43
      %p50 = scmp.eq.s32.totalorder %s34, 1
      %p51 = por %p49, %p50
      %p52 = scmp.ne.s32.totalorder %s44, %s47
      %p53 = scmp.eq.s32.totalorder %s34, 0
      %p54 = por %p52, %p53
      %p55 = scmp.ne.s32.totalorder %s44, %s47
      %p56 = scmp.eq.s32.totalorder %s39, 1
      %p57 = por %p55, %p56
      %p58 = scmp.ne.s32.totalorder %s47, %s48
      %p59 = scmp.eq.s32.totalorder %s39, 0
      %p60 = por %p58, %p59
      %p61 = scmp.ne.s32.totalorder %s47, %s48
      %p62 = scmp.eq.s32.totalorder %s40, 1
      %p63 = por %p61, %p62
      %p65 = scmp.ne.s32.totalorder %s48, %s64
      %p66 = scmp.eq.s32.totalorder %s40, 0
      %p67 = por %p65, %p66
      %s69 = sadd.s32 %s68, 1
      %p72 = scmp.eq.s32.totalorder %s34, 1
      %p73 = scmp.ne.s32.totalorder %s68, %s70
      %p74 = scmp.eq.s32.totalorder %s34, 0
      %p75 = por %p73, %p74
      %p76 = scmp.ne.s32.totalorder %s68, %s70
      %p77 = scmp.eq.s32.totalorder %s39, 1
      %p78 = por %p76, %p77
      %p79 = scmp.ne.s32.totalorder %s70, %s71
      %p80 = scmp.eq.s32.totalorder %s39, 0
      %p81 = por %p79, %p80
      %p82 = scmp.ne.s32.totalorder %s70, %s71
      %p83 = scmp.eq.s32.totalorder %s40, 1
      %p84 = por %p82, %p83
      %p86 = scmp.ne.s32.totalorder %s71, %s85
      %p87 = scmp.eq.s32.totalorder %s40, 0
      %p88 = por %p86, %p87
      %s90 = sadd.s32 %s89, 1
      %p93 = scmp.eq.s32.totalorder %s34, 1
      %p94 = scmp.ne.s32.totalorder %s89, %s91
      %p95 = scmp.eq.s32.totalorder %s34, 0
      %p96 = por %p94, %p95
      %p97 = scmp.ne.s32.totalorder %s89, %s91
      %p98 = scmp.eq.s32.totalorder %s39, 1
      %p99 = por %p97, %p98
      %p100 = scmp.ne.s32.totalorder %s91, %s92
      %p101 = scmp.eq.s32.totalorder %s39, 0
      %p102 = por %p100, %p101
      %p103 = scmp.ne.s32.totalorder %s91, %s92
      %p104 = scmp.eq.s32.totalorder %s40, 1
      %p105 = por %p103, %p104
      %p107 = scmp.ne.s32.totalorder %s92, %s106
      %p108 = scmp.eq.s32.totalorder %s40, 0
      %p109 = por %p107, %p108
      %s111 = sadd.s32 %s110, 1
      %p114 = scmp.eq.s32.totalorder %s34, 1
      %p115 = scmp.ne.s32.totalorder %s110, %s112
      %p116 = scmp.eq.s32.totalorder %s34, 0
      %p117 = por %p115, %p116
      %p118 = scmp.ne.s32.totalorder %s110, %s112
      %p119 = scmp.eq.s32.totalorder %s39, 1
      %p120 = por %p118, %p119
      %p121 = scmp.ne.s32.totalorder %s112, %s113
      %p122 = scmp.eq.s32.totalorder %s39, 0
      %p123 = por %p121, %p122
      %p124 = scmp.ne.s32.totalorder %s112, %s113
      %p125 = scmp.eq.s32.totalorder %s40, 1
      %p126 = por %p124, %p125
      %p128 = scmp.ne.s32.totalorder %s113, %s127
      %p129 = scmp.eq.s32.totalorder %s40, 0
      %p130 = por %p128, %p129
      %s132 = sadd.s32 %s131, 1
      %p135 = scmp.eq.s32.totalorder %s34, 1
      %p136 = scmp.ne.s32.totalorder %s131, %s133
      %p137 = scmp.eq.s32.totalorder %s34, 0
      %p138 = por %p136, %p137
      %p139 = scmp.ne.s32.totalorder %s131, %s133
      %p140 = scmp.eq.s32.totalorder %s39, 1
      %p141 = por %p139, %p140
      %p142 = scmp.ne.s32.totalorder %s133, %s134
      %p143 = scmp.eq.s32.totalorder %s39, 0
      %p144 = por %p142, %p143
      %p145 = scmp.ne.s32.totalorder %s133, %s134
      %p146 = scmp.eq.s32.totalorder %s40, 1
      %p147 = por %p145, %p146
      %p149 = scmp.ne.s32.totalorder %s134, %s148
      %p150 = scmp.eq.s32.totalorder %s40, 0
      %p151 = por %p149, %p150
      %s153 = sadd.s32 %s152, 1
      %p156 = scmp.eq.s32.totalorder %s34, 1
      %p157 = scmp.ne.s32.totalorder %s152, %s154
      %p158 = scmp.eq.s32.totalorder %s34, 0
      %p159 = por %p157, %p158
      %p160 = scmp.ne.s32.totalorder %s152, %s154
      %p161 = scmp.eq.s32.totalorder %s39, 1
      %p162 = por %p160, %p161
      %p163 = scmp.ne.s32.totalorder %s154, %s155
      %p164 = scmp.eq.s32.totalorder %s39, 0
      %p165 = por %p163, %p164
      %p166 = scmp.ne.s32.totalorder %s154, %s155
      %p167 = scmp.eq.s32.totalorder %s40, 1
      %p168 = por %p166, %p167
      %p170 = scmp.ne.s32.totalorder %s155, %s169
      %p171 = scmp.eq.s32.totalorder %s40, 0
      %p172 = por %p170, %p171
      %s174 = sadd.s32 %s173, 1
      %p177 = scmp.eq.s32.totalorder %s34, 1
      %p178 = scmp.ne.s32.totalorder %s173, %s175
      %p179 = scmp.eq.s32.totalorder %s34, 0
      %p180 = por %p178, %p179
      %p181 = scmp.ne.s32.totalorder %s173, %s175
      %p182 = scmp.eq.s32.totalorder %s39, 1
      %p183 = por %p181, %p182
      %p184 = scmp.ne.s32.totalorder %s175, %s176
      %p185 = scmp.eq.s32.totalorder %s39, 0
      %p186 = por %p184, %p185
      %p187 = scmp.ne.s32.totalorder %s175, %s176
      %p188 = scmp.eq.s32.totalorder %s40, 1
      %p189 = por %p187, %p188
      %p191 = scmp.ne.s32.totalorder %s176, %s190
      %p192 = scmp.eq.s32.totalorder %s40, 0
      %p193 = por %p191, %p192
      %s195 = sadd.s32 %s194, 1
      %p198 = scmp.eq.s32.totalorder %s34, 1
      %p199 = scmp.ne.s32.totalorder %s194, %s196
      %p200 = scmp.eq.s32.totalorder %s34, 0
      %p201 = por %p199, %p200
      %p202 = scmp.ne.s32.totalorder %s194, %s196
      %p203 = scmp.eq.s32.totalorder %s39, 1
      %p204 = por %p202, %p203
      %p205 = scmp.ne.s32.totalorder %s196, %s197
      %p206 = scmp.eq.s32.totalorder %s39, 0
      %p207 = por %p205, %p206
      %p208 = scmp.ne.s32.totalorder %s196, %s197
      %p209 = scmp.eq.s32.totalorder %s40, 1
      %p210 = por %p208, %p209
      %p212 = scmp.ne.s32.totalorder %s197, %s211
      %p213 = scmp.eq.s32.totalorder %s40, 0
      %p214 = por %p212, %p213
      %s216 = sadd.s32 %s215, 1
      %p219 = scmp.eq.s32.totalorder %s34, 1
      %p220 = scmp.ne.s32.totalorder %s215, %s217
      %p221 = scmp.eq.s32.totalorder %s34, 0
      %p222 = por %p220, %p221
      %p223 = scmp.ne.s32.totalorder %s215, %s217
      %p224 = scmp.eq.s32.totalorder %s39, 1
      %p225 = por %p223, %p224
      %p226 = scmp.ne.s32.totalorder %s217, %s218
      %p227 = scmp.eq.s32.totalorder %s39, 0
      %p228 = por %p226, %p227
      %p229 = scmp.ne.s32.totalorder %s217, %s218
      %p230 = scmp.eq.s32.totalorder %s40, 1
      %p231 = por %p229, %p230
      %p233 = scmp.ne.s32.totalorder %s218, %s232
      %p234 = scmp.eq.s32.totalorder %s40, 0
      %p235 = por %p233, %p234
      %s237 = sadd.s32 %s236, 1
      %p240 = scmp.eq.s32.totalorder %s34, 1
      %p241 = scmp.ne.s32.totalorder %s236, %s238
      %p242 = scmp.eq.s32.totalorder %s34, 0
      %p243 = por %p241, %p242
      %p244 = scmp.ne.s32.totalorder %s236, %s238
      %p245 = scmp.eq.s32.totalorder %s39, 1
      %p246 = por %p244, %p245
      %p247 = scmp.ne.s32.totalorder %s238, %s239
      %p248 = scmp.eq.s32.totalorder %s39, 0
      %p249 = por %p247, %p248
      %p250 = scmp.ne.s32.totalorder %s238, %s239
      %p251 = scmp.eq.s32.totalorder %s40, 1
      %p252 = por %p250, %p251
      %p254 = scmp.ne.s32.totalorder %s239, %s253
      %p255 = scmp.eq.s32.totalorder %s40, 0
      %p256 = por %p254, %p255
      %s258 = sadd.s32 %s257, 1
      %p261 = scmp.eq.s32.totalorder %s34, 1
      %p262 = scmp.ne.s32.totalorder %s257, %s259
      %p263 = scmp.eq.s32.totalorder %s34, 0
      %p264 = por %p262, %p263
      %p265 = scmp.ne.s32.totalorder %s257, %s259
      %p266 = scmp.eq.s32.totalorder %s39, 1
      %p267 = por %p265, %p266
      %p268 = scmp.ne.s32.totalorder %s259, %s260
      %p269 = scmp.eq.s32.totalorder %s39, 0
      %p270 = por %p268, %p269
      %p271 = scmp.ne.s32.totalorder %s259, %s260
      %p272 = scmp.eq.s32.totalorder %s40, 1
      %p273 = por %p271, %p272
      %p275 = scmp.ne.s32.totalorder %s260, %s274
      %p276 = scmp.eq.s32.totalorder %s40, 0
      %p277 = por %p275, %p276
      %s279 = sadd.s32 %s278, 1
      %p282 = scmp.eq.s32.totalorder %s34, 1
      %p283 = scmp.ne.s32.totalorder %s278, %s280
      %p284 = scmp.eq.s32.totalorder %s34, 0
      %p285 = por %p283, %p284
      %p286 = scmp.ne.s32.totalorder %s278, %s280
      %p287 = scmp.eq.s32.totalorder %s39, 1
      %p288 = por %p286, %p287
      %p289 = scmp.ne.s32.totalorder %s280, %s281
      %p290 = scmp.eq.s32.totalorder %s39, 0
      %p291 = por %p289, %p290
      %p292 = scmp.ne.s32.totalorder %s280, %s281
      %p293 = scmp.eq.s32.totalorder %s40, 1
      %p294 = por %p292, %p293
      %p296 = scmp.ne.s32.totalorder %s281, %s295
      %p297 = scmp.eq.s32.totalorder %s40, 0
      %p298 = por %p296, %p297
      %s300 = sadd.s32 %s299, 1
      %p303 = scmp.eq.s32.totalorder %s34, 1
      %p304 = scmp.ne.s32.totalorder %s299, %s301
      %p305 = scmp.eq.s32.totalorder %s34, 0
      %p306 = por %p304, %p305
      %p307 = scmp.ne.s32.totalorder %s299, %s301
      %p308 = scmp.eq.s32.totalorder %s39, 1
      %p309 = por %p307, %p308
      %p310 = scmp.ne.s32.totalorder %s301, %s302
      %p311 = scmp.eq.s32.totalorder %s39, 0
      %p312 = por %p310, %p311
      %p313 = scmp.ne.s32.totalorder %s301, %s302
      %p314 = scmp.eq.s32.totalorder %s40, 1
      %p315 = por %p313, %p314
      %p317 = scmp.ne.s32.totalorder %s302, %s316
      %p318 = scmp.eq.s32.totalorder %s40, 0
      %p319 = por %p317, %p318
      %s321 = sadd.s32 %s320, 1
      %p324 = scmp.eq.s32.totalorder %s34, 1
      %p325 = scmp.ne.s32.totalorder %s320, %s322
      %p326 = scmp.eq.s32.totalorder %s34, 0
      %p327 = por %p325, %p326
      %p328 = scmp.ne.s32.totalorder %s320, %s322
      %p329 = scmp.eq.s32.totalorder %s39, 1
      %p330 = por %p328, %p329
      %p331 = scmp.ne.s32.totalorder %s322, %s323
      %p332 = scmp.eq.s32.totalorder %s39, 0
      %p333 = por %p331, %p332
      %p334 = scmp.ne.s32.totalorder %s322, %s323
      %p335 = scmp.eq.s32.totalorder %s40, 1
      %p336 = por %p334, %p335
      %p338 = scmp.ne.s32.totalorder %s323, %s337
      %p339 = scmp.eq.s32.totalorder %s40, 0
      %p340 = por %p338, %p339
      %s342 = sadd.s32 %s341, 1
      %p345 = scmp.eq.s32.totalorder %s34, 1
      %p346 = scmp.ne.s32.totalorder %s341, %s343
      %p347 = scmp.eq.s32.totalorder %s34, 0
      %p348 = por %p346, %p347
      %p349 = scmp.ne.s32.totalorder %s341, %s343
      %p350 = scmp.eq.s32.totalorder %s39, 1
      %p351 = por %p349, %p350
      %p352 = scmp.ne.s32.totalorder %s343, %s344
      %p353 = scmp.eq.s32.totalorder %s39, 0
      %p354 = por %p352, %p353
      %p355 = scmp.ne.s32.totalorder %s343, %s344
      %p356 = scmp.eq.s32.totalorder %s40, 1
      %p357 = por %p355, %p356
      %p359 = scmp.ne.s32.totalorder %s344, %s358
      %p360 = scmp.eq.s32.totalorder %s40, 0
      %p361 = por %p359, %p360
      %s363 = sadd.s32 %s362, 1
      %p366 = scmp.eq.s32.totalorder %s34, 1
      %p367 = scmp.ne.s32.totalorder %s362, %s364
      %p368 = scmp.eq.s32.totalorder %s34, 0
      %p369 = por %p367, %p368
      %p370 = scmp.ne.s32.totalorder %s362, %s364
      %p371 = scmp.eq.s32.totalorder %s39, 1
      %p372 = por %p370, %p371
      %p373 = scmp.ne.s32.totalorder %s364, %s365
      %p374 = scmp.eq.s32.totalorder %s39, 0
      %p375 = por %p373, %p374
      %p376 = scmp.ne.s32.totalorder %s364, %s365
      %p377 = scmp.eq.s32.totalorder %s40, 1
      %p378 = por %p376, %p377
      %p380 = scmp.ne.s32.totalorder %s365, %s379
      %p381 = scmp.eq.s32.totalorder %s40, 0
      %p382 = por %p380, %p381
      %s384 = sadd.s32 %s383, 1
      %p387 = scmp.eq.s32.totalorder %s34, 1
      %p388 = scmp.ne.s32.totalorder %s383, %s385
      %p389 = scmp.eq.s32.totalorder %s34, 0
      %p390 = por %p388, %p389
      %p391 = scmp.ne.s32.totalorder %s383, %s385
      %p392 = scmp.eq.s32.totalorder %s39, 1
      %p393 = por %p391, %p392
      %p394 = scmp.ne.s32.totalorder %s385, %s386
      %p395 = scmp.eq.s32.totalorder %s39, 0
      %p396 = por %p394, %p395
      %p397 = scmp.ne.s32.totalorder %s385, %s386
      %p398 = scmp.eq.s32.totalorder %s40, 1
      %p399 = por %p397, %p398
      %p401 = scmp.ne.s32.totalorder %s386, %s400
      %p402 = scmp.eq.s32.totalorder %s40, 0
      %p403 = por %p401, %p402
      %s405 = sadd.s32 %s404, 1
      %p408 = scmp.eq.s32.totalorder %s34, 1
      %p409 = scmp.ne.s32.totalorder %s404, %s406
      %p410 = scmp.eq.s32.totalorder %s34, 0
      %p411 = por %p409, %p410
      %p412 = scmp.ne.s32.totalorder %s404, %s406
      %p413 = scmp.eq.s32.totalorder %s39, 1
      %p414 = por %p412, %p413
      %p415 = scmp.ne.s32.totalorder %s406, %s407
      %p416 = scmp.eq.s32.totalorder %s39, 0
      %p417 = por %p415, %p416
      %p418 = scmp.ne.s32.totalorder %s406, %s407
      %p419 = scmp.eq.s32.totalorder %s40, 1
      %p420 = por %p418, %p419
      %p422 = scmp.ne.s32.totalorder %s407, %s421
      %p423 = scmp.eq.s32.totalorder %s40, 0
      %p424 = por %p422, %p423
      %s426 = sadd.s32 %s425, 1
      %p429 = scmp.eq.s32.totalorder %s34, 1
      %p430 = scmp.ne.s32.totalorder %s425, %s427
      %p431 = scmp.eq.s32.totalorder %s34, 0
      %p432 = por %p430, %p431
      %p433 = scmp.ne.s32.totalorder %s425, %s427
      %p434 = scmp.eq.s32.totalorder %s39, 1
      %p435 = por %p433, %p434
      %p436 = scmp.ne.s32.totalorder %s427, %s428
      %p437 = scmp.eq.s32.totalorder %s39, 0
      %p438 = por %p436, %p437
      %p439 = scmp.ne.s32.totalorder %s427, %s428
      %p440 = scmp.eq.s32.totalorder %s40, 1
      %p441 = por %p439, %p440
      %p443 = scmp.ne.s32.totalorder %s428, %s442
      %p444 = scmp.eq.s32.totalorder %s40, 0
      %p445 = por %p443, %p444
      %s446 = ssub.s32 %s34, %s41
      %p447 = scmp.eq.s32.totalorder %s446, 0
      %s449 = sadd.s32 %s448, 1
      %s450 = scalar_select %p447, %s448, %s449
      %p453 = pneg %p447
      %p454 = scmp.eq.s32.totalorder %s34, 1
      %p455 = por %p453, %p454
      %p456 = scmp.ne.s32.totalorder %s448, %s451
      %p457 = scmp.eq.s32.totalorder %s34, 0
      %p458 = por %p456, %p457
      %p459 = scmp.ne.s32.totalorder %s448, %s451
      %p460 = scmp.eq.s32.totalorder %s39, 1
      %p461 = por %p459, %p460
      %p462 = scmp.ne.s32.totalorder %s451, %s452
      %p463 = scmp.eq.s32.totalorder %s39, 0
      %p464 = por %p462, %p463
      %p465 = scmp.ne.s32.totalorder %s451, %s452
      %p466 = scmp.eq.s32.totalorder %s40, 1
      %p467 = por %p465, %p466
      %p469 = scmp.ne.s32.totalorder %s452, %s468
      %p470 = scmp.eq.s32.totalorder %s40, 0
      %p471 = por %p469, %p470
      %p472 = scmp.le.s32.totalorder 1, %s34
      %p473 = scmp.lt.s32.totalorder %s34, 3
      %p474 = pnand %p472, %p473
      %p475 = pneg %p474
      // Predicated region
      $region9: #{tpu_custom_call.1} parent=5 // pred_check
        _
      $region10: #{tpu_custom_call.1} parent=5 // pred_check_branch
        %477 = sbr.rel (%p474) target = $region12
      $region11: #{tpu_custom_call.1} parent=5 // pred_region
        %s478 = ssub.s32 %s34, 1
        // Predicated region
        $region13: #{tpu_custom_call.1} parent=11 // pred_check
          %p479 = pneg %p81
        $region14: #{tpu_custom_call.1} parent=11 // pred_check_branch
          %481 = sbr.rel (%p479) target = $region16
        $region15: #{tpu_custom_call.1} parent=11 // pred_region
          %483 = vsyncadd [#allocation3], 0
          %s484 = sshll.u32 %s1, 4
          %s485 = int_to_ptr.hbm [resolvable:$true] %s484
          %s486 = sshll.u32 [#allocation2], 4
          %s487 = int_to_ptr.vmem [resolvable:$true] %s486
          %492 = dma.hbm_to_vmem [thread:$0]  %s485, 64, %s487, [#allocation3], 32, 32, 2
        $region16: #{tpu_custom_call.1} parent=11 // pred_fallthru
          _
        // Predicated region
        $region17: #{tpu_custom_call.1} parent=11 // pred_check
          %p493 = pneg %p102
        $region18: #{tpu_custom_call.1} parent=11 // pred_check_branch
          %495 = sbr.rel (%p493) target = $region20
        $region19: #{tpu_custom_call.1} parent=11 // pred_region
          %497 = vsyncadd [#allocation6], 0
          %s499 = sshll.u32 %s2, 4
          %s500 = int_to_ptr.hbm [resolvable:$true] %s499
          %s501 = sshll.u32 [#allocation5], 4
          %s502 = int_to_ptr.vmem [resolvable:$true] %s501
          %504 = dma.hbm_to_vmem [thread:$0]  %s500, 16, %s502, [#allocation6]
        $region20: #{tpu_custom_call.1} parent=11 // pred_fallthru
          _
        // Predicated region
        $region21: #{tpu_custom_call.1} parent=11 // pred_check
          %p505 = pneg %p123
        $region22: #{tpu_custom_call.1} parent=11 // pred_check_branch
          %507 = sbr.rel (%p505) target = $region24
        $region23: #{tpu_custom_call.1} parent=11 // pred_region
          _
        $region24: #{tpu_custom_call.1} parent=11 // pred_fallthru
          _
        // Predicated region
        $region25: #{tpu_custom_call.1} parent=11 // pred_check
          %p508 = pneg %p144
        $region26: #{tpu_custom_call.1} parent=11 // pred_check_branch
          %510 = sbr.rel (%p508) target = $region28
        $region27: #{tpu_custom_call.1} parent=11 // pred_region
          %512 = vsyncadd [#allocation6], 0
          %s514 = sshll.u32 %s4, 4
          %s515 = int_to_ptr.hbm [resolvable:$true] %s514
          %s516 = sshll.u32 [#allocation7], 4
          %s517 = int_to_ptr.vmem [resolvable:$true] %s516
          %519 = dma.hbm_to_vmem [thread:$0]  %s515, 16, %s517, [#allocation6]
        $region28: #{tpu_custom_call.1} parent=11 // pred_fallthru
          _
        // Predicated region
        $region29: #{tpu_custom_call.1} parent=11 // pred_check
          %p520 = pneg %p165
        $region30: #{tpu_custom_call.1} parent=11 // pred_check_branch
          %522 = sbr.rel (%p520) target = $region32
        $region31: #{tpu_custom_call.1} parent=11 // pred_region
          %524 = vsyncadd [#allocation9], 0
          %s526 = sshll.u32 %s5, 4
          %s527 = int_to_ptr.hbm [resolvable:$true] %s526
          %s528 = sshll.u32 [#allocation8], 4
          %s529 = int_to_ptr.vmem [resolvable:$true] %s528
          %531 = dma.hbm_to_vmem [thread:$0]  %s527, 32, %s529, [#allocation9]
        $region32: #{tpu_custom_call.1} parent=11 // pred_fallthru
          _
        // Predicated region
        $region33: #{tpu_custom_call.1} parent=11 // pred_check
          %p532 = pneg %p186
        $region34: #{tpu_custom_call.1} parent=11 // pred_check_branch
          %534 = sbr.rel (%p532) target = $region36
        $region35: #{tpu_custom_call.1} parent=11 // pred_region
          %536 = vsyncadd [#allocation9], 0
          %s538 = sshll.u32 %s6, 4
          %s539 = int_to_ptr.hbm [resolvable:$true] %s538
          %s540 = sshll.u32 [#allocation10], 4
          %s541 = int_to_ptr.vmem [resolvable:$true] %s540
          %543 = dma.hbm_to_vmem [thread:$0]  %s539, 16, %s541, [#allocation9]
        $region36: #{tpu_custom_call.1} parent=11 // pred_fallthru
          _
        // Predicated region
        $region37: #{tpu_custom_call.1} parent=11 // pred_check
          %p544 = pneg %p207
        $region38: #{tpu_custom_call.1} parent=11 // pred_check_branch
          %546 = sbr.rel (%p544) target = $region40
        $region39: #{tpu_custom_call.1} parent=11 // pred_region
          _
        $region40: #{tpu_custom_call.1} parent=11 // pred_fallthru
          _
        // Predicated region
        $region41: #{tpu_custom_call.1} parent=11 // pred_check
          %p547 = pneg %p228
        $region42: #{tpu_custom_call.1} parent=11 // pred_check_branch
          %549 = sbr.rel (%p547) target = $region44
        $region43: #{tpu_custom_call.1} parent=11 // pred_region
          %551 = vsyncadd [#allocation12], 0
          %s553 = sshll.u32 %s8, 4
          %s554 = int_to_ptr.hbm [resolvable:$true] %s553
          %s555 = sshll.u32 [#allocation11], 4
          %s556 = int_to_ptr.vmem [resolvable:$true] %s555
          %558 = dma.hbm_to_vmem [thread:$0]  %s554, 16, %s556, [#allocation12]
        $region44: #{tpu_custom_call.1} parent=11 // pred_fallthru
          _
        // Predicated region
        $region45: #{tpu_custom_call.1} parent=11 // pred_check
          %p559 = pneg %p249
        $region46: #{tpu_custom_call.1} parent=11 // pred_check_branch
          %561 = sbr.rel (%p559) target = $region48
        $region47: #{tpu_custom_call.1} parent=11 // pred_region
          _
        $region48: #{tpu_custom_call.1} parent=11 // pred_fallthru
          _
        // Predicated region
        $region49: #{tpu_custom_call.1} parent=11 // pred_check
          %p562 = pneg %p270
        $region50: #{tpu_custom_call.1} parent=11 // pred_check_branch
          %564 = sbr.rel (%p562) target = $region52
        $region51: #{tpu_custom_call.1} parent=11 // pred_region
          %566 = vsyncadd [#allocation12], 0
          %s568 = sshll.u32 %s10, 4
          %s569 = int_to_ptr.hbm [resolvable:$true] %s568
          %s570 = sshll.u32 [#allocation13], 4
          %s571 = int_to_ptr.vmem [resolvable:$true] %s570
          %573 = dma.hbm_to_vmem [thread:$0]  %s569, 16, %s571, [#allocation12]
        $region52: #{tpu_custom_call.1} parent=11 // pred_fallthru
          _
        // Predicated region
        $region53: #{tpu_custom_call.1} parent=11 // pred_check
          %p574 = pneg %p291
        $region54: #{tpu_custom_call.1} parent=11 // pred_check_branch
          %576 = sbr.rel (%p574) target = $region56
        $region55: #{tpu_custom_call.1} parent=11 // pred_region
          _
        $region56: #{tpu_custom_call.1} parent=11 // pred_fallthru
          _
        // Predicated region
        $region57: #{tpu_custom_call.1} parent=11 // pred_check
          %p577 = pneg %p312
        $region58: #{tpu_custom_call.1} parent=11 // pred_check_branch
          %579 = sbr.rel (%p577) target = $region60
        $region59: #{tpu_custom_call.1} parent=11 // pred_region
          %581 = vsyncadd [#allocation15], 0
          %s583 = sshll.u32 %s12, 4
          %s584 = int_to_ptr.hbm [resolvable:$true] %s583
          %s585 = sshll.u32 [#allocation14], 4
          %s586 = int_to_ptr.vmem [resolvable:$true] %s585
          %588 = dma.hbm_to_vmem [thread:$0]  %s584, 16, %s586, [#allocation15]
        $region60: #{tpu_custom_call.1} parent=11 // pred_fallthru
          _
        // Predicated region
        $region61: #{tpu_custom_call.1} parent=11 // pred_check
          %p589 = pneg %p333
        $region62: #{tpu_custom_call.1} parent=11 // pred_check_branch
          %591 = sbr.rel (%p589) target = $region64
        $region63: #{tpu_custom_call.1} parent=11 // pred_region
          _
        $region64: #{tpu_custom_call.1} parent=11 // pred_fallthru
          _
        // Predicated region
        $region65: #{tpu_custom_call.1} parent=11 // pred_check
          %p592 = pneg %p354
        $region66: #{tpu_custom_call.1} parent=11 // pred_check_branch
          %594 = sbr.rel (%p592) target = $region68
        $region67: #{tpu_custom_call.1} parent=11 // pred_region
          %596 = vsyncadd [#allocation15], 0
          %s598 = sshll.u32 %s14, 4
          %s599 = int_to_ptr.hbm [resolvable:$true] %s598
          %s600 = sshll.u32 [#allocation16], 4
          %s601 = int_to_ptr.vmem [resolvable:$true] %s600
          %603 = dma.hbm_to_vmem [thread:$0]  %s599, 16, %s601, [#allocation15]
        $region68: #{tpu_custom_call.1} parent=11 // pred_fallthru
          _
        // Predicated region
        $region69: #{tpu_custom_call.1} parent=11 // pred_check
          %p604 = pneg %p375
        $region70: #{tpu_custom_call.1} parent=11 // pred_check_branch
          %606 = sbr.rel (%p604) target = $region72
        $region71: #{tpu_custom_call.1} parent=11 // pred_region
          %608 = vsyncadd [#allocation18], 0
          %s610 = sshll.u32 %s15, 4
          %s611 = int_to_ptr.hbm [resolvable:$true] %s610
          %s612 = sshll.u32 [#allocation17], 4
          %s613 = int_to_ptr.vmem [resolvable:$true] %s612
          %615 = dma.hbm_to_vmem [thread:$0]  %s611, 64, %s613, [#allocation18]
        $region72: #{tpu_custom_call.1} parent=11 // pred_fallthru
          _
        // Predicated region
        $region73: #{tpu_custom_call.1} parent=11 // pred_check
          %p616 = pneg %p396
        $region74: #{tpu_custom_call.1} parent=11 // pred_check_branch
          %618 = sbr.rel (%p616) target = $region76
        $region75: #{tpu_custom_call.1} parent=11 // pred_region
          %620 = vsyncadd [#allocation18], 0
          %s622 = sshll.u32 %s16, 4
          %s623 = int_to_ptr.hbm [resolvable:$true] %s622
          %s624 = sshll.u32 [#allocation19], 4
          %s625 = int_to_ptr.vmem [resolvable:$true] %s624
          %627 = dma.hbm_to_vmem [thread:$0]  %s623, 16, %s625, [#allocation18]
        $region76: #{tpu_custom_call.1} parent=11 // pred_fallthru
          _
        // Predicated region
        $region77: #{tpu_custom_call.1} parent=11 // pred_check
          %p628 = pneg %p417
        $region78: #{tpu_custom_call.1} parent=11 // pred_check_branch
          %630 = sbr.rel (%p628) target = $region80
        $region79: #{tpu_custom_call.1} parent=11 // pred_region
          _
        $region80: #{tpu_custom_call.1} parent=11 // pred_fallthru
          _
        // Predicated region
        $region81: #{tpu_custom_call.1} parent=11 // pred_check
          %p631 = pneg %p438
        $region82: #{tpu_custom_call.1} parent=11 // pred_check_branch
          %633 = sbr.rel (%p631) target = $region84
        $region83: #{tpu_custom_call.1} parent=11 // pred_region
          _
        $region84: #{tpu_custom_call.1} parent=11 // pred_fallthru
          _
      $region12: #{tpu_custom_call.1} parent=5 // pred_fallthru
        _
      %p634 = scmp.lt.s32.totalorder %s34, 2
      // Predicated region
      $region85: #{tpu_custom_call.1} parent=5 // pred_check
        %p635 = pneg %p634
      $region86: #{tpu_custom_call.1} parent=5 // pred_check_branch
        %637 = sbr.rel (%p635) target = $region88
      $region87: #{tpu_custom_call.1} parent=5 // pred_region
        // Predicated region
        $region89: #{tpu_custom_call.1} parent=87 // pred_check
          %p638 = pneg %p54
        $region90: #{tpu_custom_call.1} parent=87 // pred_check_branch
          %640 = sbr.rel (%p638) target = $region92
        $region91: #{tpu_custom_call.1} parent=87 // pred_region
          %p641 = scmp.lt.s32.totalorder %s34, 1
          %s642 = scalar_select %p641, %s34, 1
          %s643 = smul.addr %s642, 2
          %s644 = smul.addr %s643, 8
          %s645 = scalar_lea.vmem %s0, %s644
        $region92: #{tpu_custom_call.1} parent=87 // pred_fallthru
          _
      $region88: #{tpu_custom_call.1} parent=5 // pred_fallthru
        _
      %p646 = scmp.le.s32.totalorder 1, %s34
      %p647 = scmp.lt.s32.totalorder %s34, 3
      %p648 = pnand %p646, %p647
      %p649 = pneg %p648
      // Predicated region
      $region93: #{tpu_custom_call.1} parent=5 // pred_check
        _
      $region94: #{tpu_custom_call.1} parent=5 // pred_check_branch
        %651 = sbr.rel (%p648) target = $region96
      $region95: #{tpu_custom_call.1} parent=5 // pred_region
        %s652 = ssub.s32 %s34, 1
        // Predicated region
        $region97: #{tpu_custom_call.1} parent=95 // pred_check
          %p653 = pneg %p81
        $region98: #{tpu_custom_call.1} parent=95 // pred_check_branch
          %655 = sbr.rel (%p653) target = $region100
        $region99: #{tpu_custom_call.1} parent=95 // pred_region
          %657 = dma.done [#allocation3], 64
        $region100: #{tpu_custom_call.1} parent=95 // pred_fallthru
          _
        // Predicated region
        $region101: #{tpu_custom_call.1} parent=95 // pred_check
          %p658 = pneg %p102
        $region102: #{tpu_custom_call.1} parent=95 // pred_check_branch
          %660 = sbr.rel (%p658) target = $region104
        $region103: #{tpu_custom_call.1} parent=95 // pred_region
          %662 = dma.done [#allocation6], 16
        $region104: #{tpu_custom_call.1} parent=95 // pred_fallthru
          _
        // Predicated region
        $region105: #{tpu_custom_call.1} parent=95 // pred_check
          %p663 = pneg %p144
        $region106: #{tpu_custom_call.1} parent=95 // pred_check_branch
          %665 = sbr.rel (%p663) target = $region108
        $region107: #{tpu_custom_call.1} parent=95 // pred_region
          %667 = dma.done [#allocation6], 16
        $region108: #{tpu_custom_call.1} parent=95 // pred_fallthru
          _
        // Predicated region
        $region109: #{tpu_custom_call.1} parent=95 // pred_check
          %p668 = pneg %p165
        $region110: #{tpu_custom_call.1} parent=95 // pred_check_branch
          %670 = sbr.rel (%p668) target = $region112
        $region111: #{tpu_custom_call.1} parent=95 // pred_region
          %672 = dma.done [#allocation9], 32
        $region112: #{tpu_custom_call.1} parent=95 // pred_fallthru
          _
        // Predicated region
        $region113: #{tpu_custom_call.1} parent=95 // pred_check
          %p673 = pneg %p186
        $region114: #{tpu_custom_call.1} parent=95 // pred_check_branch
          %675 = sbr.rel (%p673) target = $region116
        $region115: #{tpu_custom_call.1} parent=95 // pred_region
          %677 = dma.done [#allocation9], 16
        $region116: #{tpu_custom_call.1} parent=95 // pred_fallthru
          _
        // Predicated region
        $region117: #{tpu_custom_call.1} parent=95 // pred_check
          %p678 = pneg %p228
        $region118: #{tpu_custom_call.1} parent=95 // pred_check_branch
          %680 = sbr.rel (%p678) target = $region120
        $region119: #{tpu_custom_call.1} parent=95 // pred_region
          %682 = dma.done [#allocation12], 16
        $region120: #{tpu_custom_call.1} parent=95 // pred_fallthru
          _
        // Predicated region
        $region121: #{tpu_custom_call.1} parent=95 // pred_check
          %p683 = pneg %p270
        $region122: #{tpu_custom_call.1} parent=95 // pred_check_branch
          %685 = sbr.rel (%p683) target = $region124
        $region123: #{tpu_custom_call.1} parent=95 // pred_region
          %687 = dma.done [#allocation12], 16
        $region124: #{tpu_custom_call.1} parent=95 // pred_fallthru
          _
        // Predicated region
        $region125: #{tpu_custom_call.1} parent=95 // pred_check
          %p688 = pneg %p312
        $region126: #{tpu_custom_call.1} parent=95 // pred_check_branch
          %690 = sbr.rel (%p688) target = $region128
        $region127: #{tpu_custom_call.1} parent=95 // pred_region
          %692 = dma.done [#allocation15], 16
        $region128: #{tpu_custom_call.1} parent=95 // pred_fallthru
          _
        // Predicated region
        $region129: #{tpu_custom_call.1} parent=95 // pred_check
          %p693 = pneg %p354
        $region130: #{tpu_custom_call.1} parent=95 // pred_check_branch
          %695 = sbr.rel (%p693) target = $region132
        $region131: #{tpu_custom_call.1} parent=95 // pred_region
          %697 = dma.done [#allocation15], 16
        $region132: #{tpu_custom_call.1} parent=95 // pred_fallthru
          _
        // Predicated region
        $region133: #{tpu_custom_call.1} parent=95 // pred_check
          %p698 = pneg %p375
        $region134: #{tpu_custom_call.1} parent=95 // pred_check_branch
          %700 = sbr.rel (%p698) target = $region136
        $region135: #{tpu_custom_call.1} parent=95 // pred_region
          %702 = dma.done [#allocation18], 64
        $region136: #{tpu_custom_call.1} parent=95 // pred_fallthru
          _
        // Predicated region
        $region137: #{tpu_custom_call.1} parent=95 // pred_check
          %p703 = pneg %p396
        $region138: #{tpu_custom_call.1} parent=95 // pred_check_branch
          %705 = sbr.rel (%p703) target = $region140
        $region139: #{tpu_custom_call.1} parent=95 // pred_region
          %707 = dma.done [#allocation18], 16
        $region140: #{tpu_custom_call.1} parent=95 // pred_fallthru
          _
        %p708 = scmp.lt.s32.totalorder %s39, 1
        %s709 = scalar_select %p708, %s39, 1
        %s710 = smul.addr %s709, 2
        %s711 = smul.addr %s710, 8
        %s712 = scalar_lea.vmem %s0, %s711
        %p713 = pneg %p60
        %p714 = pneg %p57
        %p715 = pneg %p81
        %p716 = pneg %p78
        %p717 = pneg %p102
        %p718 = pneg %p99
        %p719 = pneg %p123
        %p720 = pneg %p120
        %p721 = pneg %p144
        %p722 = pneg %p141
        %p723 = pneg %p165
        %p724 = pneg %p162
        %p725 = pneg %p186
        %p726 = pneg %p183
        %p727 = pneg %p207
        %p728 = pneg %p204
        %p729 = pneg %p228
        %p730 = pneg %p225
        %p731 = pneg %p249
        %p732 = pneg %p246
        %p733 = pneg %p270
        %p734 = pneg %p267
        %p735 = pneg %p291
        %p736 = pneg %p288
        %p737 = pneg %p312
        %p738 = pneg %p309
        %p739 = pneg %p333
        %p740 = pneg %p330
        %p741 = pneg %p354
        %p742 = pneg %p351
        %p743 = pneg %p375
        %p744 = pneg %p372
        %p745 = pneg %p396
        %p746 = pneg %p393
        %p747 = pneg %p417
        %p748 = pneg %p414
        %p749 = pneg %p438
        %p750 = pneg %p435
        %p751 = pneg %p464
        %p752 = pneg %p461
        %s753 = sand.u32 %s451, 1
        %s754 = scalar_lea.sflag [#allocation4], %s753
        %s755 = sand.u32 %s451, 1
        %s756 = scalar_lea.vmem [#allocation20], %s755
        %p757 = scmp.lt.s32.totalorder %s39, 1
        %s758 = scalar_select %p757, %s39, 1
        %s759 = smul.addr %s758, 2
        %s760 = smul.addr %s759, 8
        %s761 = scalar_lea.vmem %s0, %s760
        %v763 = vld [vmem:[%s761] sm:$0xff]
        %v764 = vld [vmem:[%s761 + $0x8] sm:$0xff]
        %v765 = vpack.c.bf16 %v764, %v763
        %v766 = vlaneseq
        %v767 = vshrl.u32 %v766, 7
        %v768 = vadd.s32 %v767, 8
        %v769 = vld [vmem:[#allocation2] sm:$0x3]
        %vm770 = vcmask 31744
        %v772 = vsel %vm770, %v765, 0
        %vm774 = vcmask 1041408
        %v776 = vsel %vm774, %v769, 0
        %778 = vmatpush.bf16.msra.mxu0 0
        %779 = vmatpush.bf16.msra.mxu0 0
        %780 = vmatpush.bf16.msra.mxu0 0
        %781 = vmatpush.bf16.msra.mxu0 0
        %782 = vmatpush.bf16.msra.mxu0 0
        %783 = vmatpush.bf16.msra.mxu0 0
        %784 = vmatpush.bf16.msra.mxu0 0
        %785 = vmatpush.bf16.msra.mxu0 %v776
        %786 = vmatmul.bf16.gmra.mxu0 %v772
        %v787 = vpop.f32.mrf.mxu0
        %v788 = vadd.f32 0.0, %v787
        %v789 = vpop.f32.mrf.mxu0
        %v790 = vadd.f32 0.0, %v789
        %791 = vdwg.mxu0
        %vm792 = vcmp.ge.s32.totalorder %v767, 1
        %vm793 = vcmp.ge.s32.totalorder %v768, 1
        %v794 = vrot.slane %v788, 7
        %v795 = vrot.slane %v790, 7
        %vm796 = vcmp.lt.s32.totalorder %v767, 1
        %v797 = vsel %vm796, %v794, %v795
        %v798 = vsel %vm796, %v795, %v794
        %v799 = vsel %vm792, %v798, 0.0
        %v800 = vsel %vm793, %v797, 0.0
        %s801 = scalar_lea.vmem [#allocation2], 2
        %v802 = vld [vmem:[%s801] sm:$0x3]
        %v804 = vsel %vm774, %v802, 0
        %806 = vmatpush.bf16.msra.mxu0 0
        %807 = vmatpush.bf16.msra.mxu0 0
        %808 = vmatpush.bf16.msra.mxu0 0
        %809 = vmatpush.bf16.msra.mxu0 0
        %810 = vmatpush.bf16.msra.mxu0 0
        %811 = vmatpush.bf16.msra.mxu0 0
        %812 = vmatpush.bf16.msra.mxu0 0
        %813 = vmatpush.bf16.msra.mxu0 %v804
        %814 = vmatmul.bf16.gmra.mxu0 %v772
        %v815 = vpop.f32.mrf.mxu0
        %v816 = vadd.f32 0.0, %v815
        %v817 = vpop.f32.mrf.mxu0
        %v818 = vadd.f32 0.0, %v817
        %819 = vdwg.mxu0
        %v820 = vadd.f32 %v799, %v816
        %v821 = vadd.f32 %v800, %v818
        %v822 = vld [vmem:[#allocation5] sm:$0x1]
        %v824 = vperm.slane %v822, 0
        %v826 = vadd.f32 %v820, %v824
        %v827 = vadd.f32 %v821, %v824
        %v828 = vmax.f32 %v826, 0.0
        %v829 = vmax.f32 %v827, 0.0
        %v830 = vpack.c.bf16 %v829, %v828
        %v831 = vld [vmem:[%s3] sm:$0xf]
        %vm832 = vcmask 64512
        %v834 = vsel %vm832, %v830, 0
        %vm836 = vcmask 1043456
        %v838 = vsel %vm836, %v831, 0
        %840 = vmatpush.bf16.msra.mxu0 0
        %841 = vmatpush.bf16.msra.mxu0 0
        %842 = vmatpush.bf16.msra.mxu0 0
        %843 = vmatpush.bf16.msra.mxu0 0
        %844 = vmatpush.bf16.msra.mxu0 0
        %845 = vmatpush.bf16.msra.mxu0 0
        %846 = vmatpush.bf16.msra.mxu0 0
        %847 = vmatpush.bf16.msra.mxu0 %v838
        %848 = vmatmul.bf16.gmra.mxu0 %v834
        %v849 = vpop.f32.mrf.mxu0
        %v850 = vadd.f32 0.0, %v849
        %v851 = vpop.f32.mrf.mxu0
        %v852 = vadd.f32 0.0, %v851
        %853 = vdwg.mxu0
        %v854 = vrot.slane %v850, 7
        %v855 = vrot.slane %v852, 7
        %v856 = vsel %vm796, %v854, %v855
        %v857 = vsel %vm796, %v855, %v854
        %v858 = vsel %vm792, %v857, 0.0
        %v859 = vsel %vm793, %v856, 0.0
        %s860 = scalar_lea.vmem %s3, 4
        %v861 = vld [vmem:[%s860] sm:$0xf]
        %v863 = vsel %vm836, %v861, 0
        %865 = vmatpush.bf16.msra.mxu0 0
        %866 = vmatpush.bf16.msra.mxu0 0
        %867 = vmatpush.bf16.msra.mxu0 0
        %868 = vmatpush.bf16.msra.mxu0 0
        %869 = vmatpush.bf16.msra.mxu0 0
        %870 = vmatpush.bf16.msra.mxu0 0
        %871 = vmatpush.bf16.msra.mxu0 0
        %872 = vmatpush.bf16.msra.mxu0 %v863
        %873 = vmatmul.bf16.gmra.mxu0 %v834
        %v874 = vpop.f32.mrf.mxu0
        %v875 = vadd.f32 0.0, %v874
        %v876 = vpop.f32.mrf.mxu0
        %v877 = vadd.f32 0.0, %v876
        %878 = vdwg.mxu0
        %v879 = vadd.f32 %v858, %v875
        %v880 = vadd.f32 %v859, %v877
        %v881 = vld [vmem:[#allocation7] sm:$0x1]
        %v883 = vperm.slane %v881, 0
        %v885 = vadd.f32 %v879, %v883
        %v886 = vadd.f32 %v880, %v883
        %v887 = vmax.f32 %v885, 0.0
        %v888 = vmax.f32 %v886, 0.0
        %v889 = vld [vmem:[#allocation8] sm:$0x3]
        %v890 = vld [vmem:[#allocation10] sm:$0x1]
        %v892 = vperm.slane %v890, 0
        %v895 = vsel %vm774, %v889, 0
        %897 = vmatpush.bf16.msra.mxu0 0
        %898 = vmatpush.bf16.msra.mxu0 0
        %899 = vmatpush.bf16.msra.mxu0 0
        %900 = vmatpush.bf16.msra.mxu0 0
        %901 = vmatpush.bf16.msra.mxu0 0
        %902 = vmatpush.bf16.msra.mxu0 0
        %903 = vmatpush.bf16.msra.mxu0 0
        %904 = vmatpush.bf16.msra.mxu0 %v895
        %905 = vmatmul.bf16.gmra.mxu0 %v772
        %v906 = vpop.f32.mrf.mxu0
        %v907 = vadd.f32 %v892, %v906
        %v908 = vpop.f32.mrf.mxu0
        %v909 = vadd.f32 %v892, %v908
        %910 = vdwg.mxu0
        %v911 = vadd.f32 %v887, %v907
        %v912 = vadd.f32 %v888, %v909
        %v913 = vmax.f32 %v911, 0.0
        %v914 = vmax.f32 %v912, 0.0
        %v915 = vpack.c.bf16 %v914, %v913
        %v916 = vld [vmem:[%s7] sm:$0xf]
        %v918 = vsel %vm832, %v915, 0
        %v921 = vsel %vm836, %v916, 0
        %923 = vmatpush.bf16.msra.mxu0 0
        %924 = vmatpush.bf16.msra.mxu0 0
        %925 = vmatpush.bf16.msra.mxu0 0
        %926 = vmatpush.bf16.msra.mxu0 0
        %927 = vmatpush.bf16.msra.mxu0 0
        %928 = vmatpush.bf16.msra.mxu0 0
        %929 = vmatpush.bf16.msra.mxu0 0
        %930 = vmatpush.bf16.msra.mxu0 %v921
        %931 = vmatmul.bf16.gmra.mxu0 %v918
        %v932 = vpop.f32.mrf.mxu0
        %v933 = vadd.f32 0.0, %v932
        %v934 = vpop.f32.mrf.mxu0
        %v935 = vadd.f32 0.0, %v934
        %936 = vdwg.mxu0
        %vm937 = vcmp.ge.s32.totalorder %v767, 2
        %vm938 = vcmp.ge.s32.totalorder %v768, 2
        %v939 = vrot.slane %v933, 6
        %v940 = vrot.slane %v935, 6
        %vm941 = vcmp.lt.s32.totalorder %v767, 2
        %v942 = vsel %vm941, %v939, %v940
        %v943 = vsel %vm941, %v940, %v939
        %v944 = vsel %vm937, %v943, 0.0
        %v945 = vsel %vm938, %v942, 0.0
        %s946 = scalar_lea.vmem %s7, 4
        %v947 = vld [vmem:[%s946] sm:$0xf]
        %v949 = vsel %vm836, %v947, 0
        %951 = vmatpush.bf16.msra.mxu0 0
        %952 = vmatpush.bf16.msra.mxu0 0
        %953 = vmatpush.bf16.msra.mxu0 0
        %954 = vmatpush.bf16.msra.mxu0 0
        %955 = vmatpush.bf16.msra.mxu0 0
        %956 = vmatpush.bf16.msra.mxu0 0
        %957 = vmatpush.bf16.msra.mxu0 0
        %958 = vmatpush.bf16.msra.mxu0 %v949
        %959 = vmatmul.bf16.gmra.mxu0 %v918
        %v960 = vpop.f32.mrf.mxu0
        %v961 = vadd.f32 0.0, %v960
        %v962 = vpop.f32.mrf.mxu0
        %v963 = vadd.f32 0.0, %v962
        %964 = vdwg.mxu0
        %v965 = vadd.f32 %v944, %v961
        %v966 = vadd.f32 %v945, %v963
        %v967 = vld [vmem:[#allocation11] sm:$0x1]
        %v969 = vperm.slane %v967, 0
        %v971 = vadd.f32 %v965, %v969
        %v972 = vadd.f32 %v966, %v969
        %v973 = vmax.f32 %v971, 0.0
        %v974 = vmax.f32 %v972, 0.0
        %v975 = vpack.c.bf16 %v974, %v973
        %v976 = vld [vmem:[%s9] sm:$0xf]
        %v978 = vsel %vm832, %v975, 0
        %v981 = vsel %vm836, %v976, 0
        %983 = vmatpush.bf16.msra.mxu0 0
        %984 = vmatpush.bf16.msra.mxu0 0
        %985 = vmatpush.bf16.msra.mxu0 0
        %986 = vmatpush.bf16.msra.mxu0 0
        %987 = vmatpush.bf16.msra.mxu0 0
        %988 = vmatpush.bf16.msra.mxu0 0
        %989 = vmatpush.bf16.msra.mxu0 0
        %990 = vmatpush.bf16.msra.mxu0 %v981
        %991 = vmatmul.bf16.gmra.mxu0 %v978
        %v992 = vpop.f32.mrf.mxu0
        %v993 = vadd.f32 0.0, %v992
        %v994 = vpop.f32.mrf.mxu0
        %v995 = vadd.f32 0.0, %v994
        %996 = vdwg.mxu0
        %v997 = vrot.slane %v993, 6
        %v998 = vrot.slane %v995, 6
        %v999 = vsel %vm941, %v997, %v998
        %v1000 = vsel %vm941, %v998, %v997
        %v1001 = vsel %vm937, %v1000, 0.0
        %v1002 = vsel %vm938, %v999, 0.0
        %s1003 = scalar_lea.vmem %s9, 4
        %v1004 = vld [vmem:[%s1003] sm:$0xf]
        %v1006 = vsel %vm836, %v1004, 0
        %1008 = vmatpush.bf16.msra.mxu0 0
        %1009 = vmatpush.bf16.msra.mxu0 0
        %1010 = vmatpush.bf16.msra.mxu0 0
        %1011 = vmatpush.bf16.msra.mxu0 0
        %1012 = vmatpush.bf16.msra.mxu0 0
        %1013 = vmatpush.bf16.msra.mxu0 0
        %1014 = vmatpush.bf16.msra.mxu0 0
        %1015 = vmatpush.bf16.msra.mxu0 %v1006
        %1016 = vmatmul.bf16.gmra.mxu0 %v978
        %v1017 = vpop.f32.mrf.mxu0
        %v1018 = vadd.f32 0.0, %v1017
        %v1019 = vpop.f32.mrf.mxu0
        %v1020 = vadd.f32 0.0, %v1019
        %1021 = vdwg.mxu0
        %v1022 = vadd.f32 %v1001, %v1018
        %v1023 = vadd.f32 %v1002, %v1020
        %v1024 = vld [vmem:[#allocation13] sm:$0x1]
        %v1026 = vperm.slane %v1024, 0
        %v1028 = vadd.f32 %v1022, %v1026
        %v1029 = vadd.f32 %v1023, %v1026
        %v1030 = vmax.f32 %v1028, 0.0
        %v1031 = vmax.f32 %v1029, 0.0
        %v1032 = vadd.f32 %v1030, %v913
        %v1033 = vadd.f32 %v1031, %v914
        %v1034 = vmax.f32 %v1032, 0.0
        %v1035 = vmax.f32 %v1033, 0.0
        %v1036 = vpack.c.bf16 %v1035, %v1034
        %v1037 = vld [vmem:[%s11] sm:$0xf]
        %v1039 = vsel %vm832, %v1036, 0
        %v1042 = vsel %vm836, %v1037, 0
        %1044 = vmatpush.bf16.msra.mxu0 0
        %1045 = vmatpush.bf16.msra.mxu0 0
        %1046 = vmatpush.bf16.msra.mxu0 0
        %1047 = vmatpush.bf16.msra.mxu0 0
        %1048 = vmatpush.bf16.msra.mxu0 0
        %1049 = vmatpush.bf16.msra.mxu0 0
        %1050 = vmatpush.bf16.msra.mxu0 0
        %1051 = vmatpush.bf16.msra.mxu0 %v1042
        %1052 = vmatmul.bf16.gmra.mxu0 %v1039
        %v1053 = vpop.f32.mrf.mxu0
        %v1054 = vadd.f32 0.0, %v1053
        %v1055 = vpop.f32.mrf.mxu0
        %v1056 = vadd.f32 0.0, %v1055
        %1057 = vdwg.mxu0
        %vm1058 = vcmp.ge.s32.totalorder %v767, 4
        %vm1059 = vcmp.ge.s32.totalorder %v768, 4
        %v1060 = vrot.slane %v1054, 4
        %v1061 = vrot.slane %v1056, 4
        %vm1062 = vcmp.lt.s32.totalorder %v767, 4
        %v1063 = vsel %vm1062, %v1060, %v1061
        %v1064 = vsel %vm1062, %v1061, %v1060
        %v1065 = vsel %vm1058, %v1064, 0.0
        %v1066 = vsel %vm1059, %v1063, 0.0
        %s1067 = scalar_lea.vmem %s11, 4
        %v1068 = vld [vmem:[%s1067] sm:$0xf]
        %v1070 = vsel %vm836, %v1068, 0
        %1072 = vmatpush.bf16.msra.mxu0 0
        %1073 = vmatpush.bf16.msra.mxu0 0
        %1074 = vmatpush.bf16.msra.mxu0 0
        %1075 = vmatpush.bf16.msra.mxu0 0
        %1076 = vmatpush.bf16.msra.mxu0 0
        %1077 = vmatpush.bf16.msra.mxu0 0
        %1078 = vmatpush.bf16.msra.mxu0 0
        %1079 = vmatpush.bf16.msra.mxu0 %v1070
        %1080 = vmatmul.bf16.gmra.mxu0 %v1039
        %v1081 = vpop.f32.mrf.mxu0
        %v1082 = vadd.f32 0.0, %v1081
        %v1083 = vpop.f32.mrf.mxu0
        %v1084 = vadd.f32 0.0, %v1083
        %1085 = vdwg.mxu0
        %v1086 = vadd.f32 %v1065, %v1082
        %v1087 = vadd.f32 %v1066, %v1084
        %v1088 = vld [vmem:[#allocation14] sm:$0x1]
        %v1090 = vperm.slane %v1088, 0
        %v1092 = vadd.f32 %v1086, %v1090
        %v1093 = vadd.f32 %v1087, %v1090
        %v1094 = vmax.f32 %v1092, 0.0
        %v1095 = vmax.f32 %v1093, 0.0
        %v1096 = vpack.c.bf16 %v1095, %v1094
        %v1097 = vld [vmem:[%s13] sm:$0xf]
        %v1098 = vld [vmem:[%s13 + $0x4] sm:$0xf]
        %v1101 = vunpack.c.l.b16 %v1097
        %v1102 = vunpack.c.l.b16 %v1098
        %v1103 = vpack.c.b16 %v1102, %v1101
        %vm1105 = vcmask 130048
        %v1107 = vsel %vm1105, %v1096, 0
        %1109 = vmatpush.bf16.msra.mxu0 0
        %1110 = vmatpush.bf16.msra.mxu0 0
        %1111 = vmatpush.bf16.msra.mxu0 0
        %1112 = vmatpush.bf16.msra.mxu0 0
        %1113 = vmatpush.bf16.msra.mxu0 0
        %1114 = vmatpush.bf16.msra.mxu0 0
        %1115 = vmatpush.bf16.msra.mxu0 0
        %1116 = vmatpush.bf16.msra.mxu0 %v1103
        %1117 = vmatmul.bf16.gmra.mxu0 %v1107
        %v1118 = vpop.f32.mrf.mxu0
        %v1119 = vadd.f32 0.0, %v1118
        %v1120 = vpop.f32.mrf.mxu0
        %v1121 = vadd.f32 0.0, %v1120
        %1122 = vdwg.mxu0
        %v1123 = vrot.slane %v1119, 4
        %v1124 = vrot.slane %v1121, 4
        %v1125 = vsel %vm1062, %v1123, %v1124
        %v1126 = vsel %vm1062, %v1124, %v1123
        %v1127 = vsel %vm1058, %v1126, 0.0
        %v1128 = vsel %vm1059, %v1125, 0.0
        %s1129 = scalar_lea.vmem %s13, 8
        %v1130 = vld [vmem:[%s1129] sm:$0xf]
        %v1131 = vld [vmem:[%s1129 + $0x4] sm:$0xf]
        %v1134 = vunpack.c.l.b16 %v1130
        %v1135 = vunpack.c.l.b16 %v1131
        %v1136 = vpack.c.b16 %v1135, %v1134
        %1138 = vmatpush.bf16.msra.mxu0 0
        %1139 = vmatpush.bf16.msra.mxu0 0
        %1140 = vmatpush.bf16.msra.mxu0 0
        %1141 = vmatpush.bf16.msra.mxu0 0
        %1142 = vmatpush.bf16.msra.mxu0 0
        %1143 = vmatpush.bf16.msra.mxu0 0
        %1144 = vmatpush.bf16.msra.mxu0 0
        %1145 = vmatpush.bf16.msra.mxu0 %v1136
        %1146 = vmatmul.bf16.gmra.mxu0 %v1107
        %v1147 = vpop.f32.mrf.mxu0
        %v1148 = vadd.f32 0.0, %v1147
        %v1149 = vpop.f32.mrf.mxu0
        %v1150 = vadd.f32 0.0, %v1149
        %1151 = vdwg.mxu0
        %v1152 = vadd.f32 %v1127, %v1148
        %v1153 = vadd.f32 %v1128, %v1150
        %v1154 = vld [vmem:[#allocation16] sm:$0x1]
        %v1156 = vperm.slane %v1154, 0
        %v1158 = vadd.f32 %v1152, %v1156
        %v1159 = vadd.f32 %v1153, %v1156
        %v1160 = vmax.f32 %v1158, 0.0
        %v1161 = vmax.f32 %v1159, 0.0
        %v1162 = vld [vmem:[#allocation17] sm:$0xf]
        %v1163 = vld [vmem:[#allocation19] sm:$0x1]
        %v1165 = vperm.slane %v1163, 0
        %v1168 = vsel %vm836, %v1162, 0
        %1170 = vmatpush.bf16.msra.mxu0 0
        %1171 = vmatpush.bf16.msra.mxu0 0
        %1172 = vmatpush.bf16.msra.mxu0 0
        %1173 = vmatpush.bf16.msra.mxu0 0
        %1174 = vmatpush.bf16.msra.mxu0 0
        %1175 = vmatpush.bf16.msra.mxu0 0
        %1176 = vmatpush.bf16.msra.mxu0 0
        %1177 = vmatpush.bf16.msra.mxu0 %v1168
        %1178 = vmatmul.bf16.gmra.mxu0 %v1039
        %v1179 = vpop.f32.mrf.mxu0
        %v1180 = vadd.f32 %v1165, %v1179
        %v1181 = vpop.f32.mrf.mxu0
        %v1182 = vadd.f32 %v1165, %v1181
        %1183 = vdwg.mxu0
        %v1184 = vadd.f32 %v1160, %v1180
        %v1185 = vadd.f32 %v1161, %v1182
        %v1186 = vmax.f32 %v1184, 0.0
        %v1187 = vmax.f32 %v1185, 0.0
        %v1188 = vsel %vm1105, %v1186, 0.0
        %v1189 = vsel %vm1105, %v1187, 0.0
        %v1190 = vadd.f32 %v1188, %v1189
        %v1191 = vrot.slane %v1190, 4
        %v1192 = vadd.f32 %v1190, %v1191
        %v1193 = vrot.slane %v1192, 2
        %v1194 = vadd.f32 %v1192, %v1193
        %v1195 = vrot.slane %v1194, 1
        %v1196 = vadd.f32 %v1194, %v1195
        %v1197 = vpack.c.bf16 %v1196, %v1196
        %v1198 = vld [vmem:[%s17] sm:$0xf]
        %v1199 = vld [vmem:[%s17 + $0x4] sm:$0xf]
        %v1200 = vld [vmem:[%s18] sm:$0x1]
        %v1203 = vunpack.c.l.b16 %v1198
        %v1204 = vunpack.c.l.b16 %v1199
        %v1205 = vpack.c.b16 %v1204, %v1203
        %v1208 = vsel %vm1105, %v1197, 0
        %1210 = vmatpush.bf16.msra.mxu0 0
        %1211 = vmatpush.bf16.msra.mxu0 0
        %1212 = vmatpush.bf16.msra.mxu0 0
        %1213 = vmatpush.bf16.msra.mxu0 0
        %1214 = vmatpush.bf16.msra.mxu0 0
        %1215 = vmatpush.bf16.msra.mxu0 0
        %1216 = vmatpush.bf16.msra.mxu0 0
        %1217 = vmatpush.bf16.msra.mxu0 %v1205
        %1218 = vmatmul.bf16.gmra.mxu0 %v1208
        %v1219 = vpop.f32.mrf.mxu0
        %v1220 = vadd.f32 %v1200, %v1219
        %v1221 = vpop.f32.mrf.mxu0
        %1222 = vdwg.mxu0
        %vm1223 = vcmask 253952
        %1224 = vst.msk [vmem:[%s756] sm:$0x1] %vm1223, %v1220
        %s1225 = sand.u32 %s451, 1
        %s1226 = scalar_lea.sflag [#allocation4], %s1225
        %s1227 = sand.u32 %s451, 1
        %s1228 = scalar_lea.vmem [#allocation20], %s1227
        // Predicated region
        $region141: #{tpu_custom_call.1} parent=95 // pred_check
          %p1229 = pneg %p461
        $region142: #{tpu_custom_call.1} parent=95 // pred_check_branch
          %1231 = sbr.rel (%p1229) target = $region144
        $region143: #{tpu_custom_call.1} parent=95 // pred_region
          %1233 = vsyncadd %s1226, 0
          %s1234 = scalar_lea.hbm %s19, %s39
          %s1236 = sshll.u32 %s1228, 4
          %s1237 = int_to_ptr.vmem [resolvable:$true] %s1236
          %s1238 = sshll.u32 %s1234, 4
          %s1239 = int_to_ptr.hbm [resolvable:$true] %s1238
          %1241 = dma.vmem_to_hbm [thread:$0]  %s1237, 16, %s1239, %s1226
        $region144: #{tpu_custom_call.1} parent=95 // pred_fallthru
          _
      $region96: #{tpu_custom_call.1} parent=5 // pred_fallthru
        _
      %p1242 = scmp.le.s32.totalorder 2, %s34
      // Predicated region
      $region145: #{tpu_custom_call.1} parent=5 // pred_check
        %p1243 = pneg %p1242
      $region146: #{tpu_custom_call.1} parent=5 // pred_check_branch
        %1245 = sbr.rel (%p1243) target = $region148
      $region147: #{tpu_custom_call.1} parent=5 // pred_region
        %s1246 = ssub.s32 %s34, 2
        // Predicated region
        $region149: #{tpu_custom_call.1} parent=147 // pred_check
          %p1247 = pneg %p467
        $region150: #{tpu_custom_call.1} parent=147 // pred_check_branch
          %1249 = sbr.rel (%p1247) target = $region152
        $region151: #{tpu_custom_call.1} parent=147 // pred_region
          %s1250 = sand.u32 %s452, 1
          %s1251 = scalar_lea.sflag [#allocation4], %s1250
          %s1252 = sand.u32 %s452, 1
          %s1253 = scalar_lea.vmem [#allocation20], %s1252
          %1255 = dma.done %s1251, 16
        $region152: #{tpu_custom_call.1} parent=147 // pred_fallthru
          _
      $region148: #{tpu_custom_call.1} parent=5 // pred_fallthru
        _
    $region6: #{tpu_custom_call.1} parent=1 // loop_footer
      %s38 = sadd.s32 1, %s34
    $region7: #{tpu_custom_call.1} parent=1 // loop_footer_branch
      %33 = sbr.rel target = $region3
    $region8: #{tpu_custom_call.1} parent=1 // loop_exit
      _
    %1256 = vsyncpa [#allocation3], 1
    %s1257 = scalar_lea.sflag [#allocation3], 1
    %1258 = vsyncpa %s1257, 1
    %1259 = vsyncpa [#allocation6], 1
    %1260 = vsyncpa [#allocation9], 1
    %1261 = vsyncpa [#allocation12], 1
    %1262 = vsyncpa [#allocation15], 1
    %1263 = vsyncpa [#allocation18], 1
    %1264 = vsyncpa [#allocation4], 1
    %s1265 = scalar_lea.sflag [#allocation4], 1
    %1266 = vsyncpa %s1265, 1

</llo_original>
